<compile_context>
chip_gen: v6e
topology: v6e:2x2x1
jax: 0.10.0
libtpu: 0.0.40
codegen_flags: <defaults>
</compile_context>

<pallas_src>
import functools

import jax
import jax.numpy as jnp
from jax.experimental import pallas as pl
from jax.experimental.pallas import tpu as pltpu

BN_EPS = 1e-5


# ----------------------------------------------------------------------------
# Pallas kernel: one tile of R "super-rows" (each super-row = one output H row
# of one batch element = Wo output pixels).
#   x_ref     : (R, 2, Wo, 2*Cin)   dim1 = H parity, last dim = (W parity, Cin)
#   w1_ref    : (2*Cin, Cout)       conv1 weights (BN scale folded), zero rows for odd-W cols
#   w2_ref    : (2*Cin, Cout)       conv2 weights (BN scale folded), zero rows for even-W cols
#   shift_ref : (1, Cout)           BN shift (f32)
#   o_ref     : (R, Wo*Cout)        lane-dense packed output block
# ----------------------------------------------------------------------------
def _fr_kernel(x_ref, w1_ref, w2_ref, shift_ref, o_ref):
    rr, _, wo, twoc = x_ref.shape
    cout = shift_ref.shape[-1]

    # ReLU commutes with the spatial subsample, so it is applied on the
    # already-subsampled operands only.
    xe = jnp.maximum(x_ref[:, 0, :, :], 0).reshape(rr * wo, twoc)   # even H rows
    xo = jnp.maximum(x_ref[:, 1, :, :], 0).reshape(rr * wo, twoc)   # odd  H rows

    # Two dots, one full-width (Cout) result: conv1 lands in cols [:Cout/2] via
    # w1cat, conv2 in cols [Cout/2:] via w2cat (each weight is zero elsewhere),
    # so no channel concat is needed anywhere.
    y = jnp.dot(xe, w1_ref[...], preferred_element_type=jnp.float32,
                precision=jax.lax.Precision.HIGHEST)
    y = y + jnp.dot(xo, w2_ref[...], preferred_element_type=jnp.float32,
                    precision=jax.lax.Precision.HIGHEST)
    y = (y + shift_ref[...]).astype(o_ref.dtype)

    # Pack (R*Wo, Cout) -> (R, Wo*Cout): split the row dim (layout-preserving),
    # then store each output pixel into its static lane window of the dense
    # output block. The block buffer / HBM writeback DMA stay fully lane-dense
    # even for Cout < 128 (and the windows are unmasked whenever Cout % 128 == 0).
    y = y.reshape(rr, wo, cout)
    for wi in range(wo):   # static unroll (Wo is small for DARTS cells)
        o_ref[:, wi * cout:(wi + 1) * cout] = y[:, wi, :]


def _pick_super_row_tile(n_rows, bytes_per_row, pixels_per_row,
                         max_bytes, max_pixels):
    """Pick R (super-rows per grid step).

    Constraints: R == n_rows (single block) or R a multiple of 8 dividing n_rows
    (so the (R, Wo*Cout) out block respects the (8, 128) rule exactly, no padding).
    Small problems run as a single tile (per-step overhead / v7x megacore gating);
    larger ones are split under byte/pixel caps sized for the smallest VMEM budget.
    """
    limit = max(1, min(max_bytes // max(bytes_per_row, 1),
                       max_pixels // max(pixels_per_row, 1)))
    if n_rows <= limit:
        return n_rows
    r = (min(limit, n_rows) // 8) * 8
    while r >= 8:
        if n_rows % r == 0:
            return r
        r -= 8
    return n_rows   # awkward factorization: fall back to one (full-dim) block


# ----------------------------------------------------------------------------
# NHWC-native entry point (no transposes; preferred when activations are
# already channels-last).
# ----------------------------------------------------------------------------
def factorized_reduce_nhwc(x_nhwc, params, *,
                           max_tile_bytes=4 << 20, max_tile_pixels=2048):
    w1, w2 = params['w1'], params['w2']
    gamma, beta = params['gamma'], params['beta']
    mean, var = params['mean'], params['var']

    n, h, w, cin = x_nhwc.shape
    assert h % 2 == 0 and w % 2 == 0, 'FactorizedReduce requires even H and W'
    chalf = w1.shape[-1]
    cout = 2 * chalf
    assert w1.shape == (cin, chalf) and w2.shape == (cin, chalf)
    dt = x_nhwc.dtype

    # Fold BN (inference form):  BN(y) = y * scale + shift.
    scale = gamma * jax.lax.rsqrt(var + BN_EPS)
    shift = (beta - mean * scale).reshape(1, cout).astype(jnp.float32)
    w1s = w1 * scale[:chalf][None, :]
    w2s = w2 * scale[chalf:][None, :]

    # Zero-padded weights over the (even-W-col | odd-W-col) channel groups:
    #   w1cat rows [0, Cin)      -> conv1 (even W col), output cols [0, Cout/2)
    #   w2cat rows [Cin, 2*Cin)  -> conv2 (odd  W col), output cols [Cout/2, Cout)
    zh = jnp.zeros((cin, chalf), jnp.float32)
    zf = jnp.zeros((cin, cout), jnp.float32)
    w1cat = jnp.concatenate([jnp.concatenate([w1s, zh], axis=1), zf], axis=0).astype(dt)
    w2cat = jnp.concatenate([zf, jnp.concatenate([zh, w2s], axis=1)], axis=0).astype(dt)

    ho, wo = h // 2, w // 2
    n_rows = n * ho
    # FREE reshape: super-row m = (n, ho); dim1 = H parity; last dim = (W parity, C).
    xg = x_nhwc.reshape(n_rows, 2, wo, 2 * cin)

    bytes_per_row = 2 * wo * 2 * cin * x_nhwc.dtype.itemsize
    r = _pick_super_row_tile(n_rows, bytes_per_row, wo, max_tile_bytes, max_tile_pixels)

    out2 = pl.pallas_call(
        _fr_kernel,
        out_shape=jax.ShapeDtypeStruct((n_rows, wo * cout), dt),
        grid_spec=pltpu.PrefetchScalarGridSpec(
            num_scalar_prefetch=0,
            grid=(n_rows // r,),
            in_specs=[
                pl.BlockSpec((r, 2, wo, 2 * cin), lambda g: (g, 0, 0, 0)),
                pl.BlockSpec((2 * cin, cout), lambda g: (0, 0)),   # VMEM-resident
                pl.BlockSpec((2 * cin, cout), lambda g: (0, 0)),   # VMEM-resident
                pl.BlockSpec((1, cout), lambda g: (0, 0)),         # VMEM-resident
            ],
            out_specs=pl.BlockSpec((r, wo * cout), lambda g: (g, 0)),
        ),
        compiler_params=pltpu.CompilerParams(
            dimension_semantics=("parallel",),
            vmem_limit_bytes=32 * 1024 * 1024,
        ),
    )(xg, w1cat, w2cat, shift)

    return out2.reshape(n, ho, wo, cout)   # FREE reshape back to NHWC


# ----------------------------------------------------------------------------
# Public wrapper: NCHW in / NCHW out, matching the PyTorch module.
# ----------------------------------------------------------------------------
def factorized_reduce(x_nchw, params, **tile_kwargs):
    # The two transposes below are pure layout plumbing for PyTorch (NCHW) parity;
    # call factorized_reduce_nhwc directly when activations are channels-last.
    x_nhwc = jnp.transpose(x_nchw, (0, 2, 3, 1))
    out = factorized_reduce_nhwc(x_nhwc, params, **tile_kwargs)
    return jnp.transpose(out, (0, 3, 1, 2))


# Pure-JAX reference (same semantics as the PyTorch module, inference BN).
def factorized_reduce_ref(x_nchw, params):
    w1, w2 = params['w1'], params['w2']
    gamma, beta = params['gamma'], params['beta']
    mean, var = params['mean'], params['var']
    x = jnp.maximum(x_nchw.astype(jnp.float32), 0.0)
    x1 = x[:, :, ::2, ::2]
    x2 = x[:, :, 1::2, 1::2]
    y1 = jnp.einsum('nchw,cd->ndhw', x1, w1, precision=jax.lax.Precision.HIGHEST)
    y2 = jnp.einsum('nchw,cd->ndhw', x2, w2, precision=jax.lax.Precision.HIGHEST)
    y = jnp.concatenate([y1, y2], axis=1)
    scale = gamma * jax.lax.rsqrt(var + BN_EPS)
    shift = beta - mean * scale
    return y * scale[None, :, None, None] + shift[None, :, None, None]


def init_params(key, in_channels, out_channels):
    assert out_channels % 2 == 0
    k1, k2, k3, k4, k5, k6 = jax.random.split(key, 6)
    chalf = out_channels // 2
    w1 = jax.random.normal(k1, (in_channels, chalf), jnp.float32) / jnp.sqrt(float(in_channels))
    w2 = jax.random.normal(k2, (in_channels, chalf), jnp.float32) / jnp.sqrt(float(in_channels))
    gamma = 1.0 + 0.1 * jax.random.normal(k3, (out_channels,), jnp.float32)
    beta = 0.1 * jax.random.normal(k4, (out_channels,), jnp.float32)
    mean = 0.1 * jax.random.normal(k5, (out_channels,), jnp.float32)
    var = 1.0 + 0.1 * jax.random.uniform(k6, (out_channels,), jnp.float32)
    # TODO(synk): BatchNorm is implemented in folded inference form only;
    # training-mode batch statistics / running-stat updates are not modeled.
    return dict(w1=w1, w2=w2, gamma=gamma, beta=beta, mean=mean, var=var)


if __name__ == "__main__":
    key = jax.random.PRNGKey(0)
    kx1, kp1, kx2, kp2, kx3, kp3 = jax.random.split(key, 6)

    # Case 1: f32, N=2, Cin=16, Cout=32, H=W=16  -> single grid step, Wo=8.
    x1 = jax.random.normal(kx1, (2, 16, 16, 16), jnp.float32)
    p1 = init_params(kp1, 16, 32)
    out1 = jax.block_until_ready(jax.jit(factorized_reduce)(x1, p1))
    ref1 = factorized_reduce_ref(x1, p1)
    assert out1.shape == (2, 32, 8, 8)
    assert jnp.allclose(out1, ref1, atol=2e-3, rtol=2e-3), \
        float(jnp.max(jnp.abs(out1 - ref1)))

    # Case 2: bf16 activation path (halved HBM reads), N=2, Cin=8, Cout=16, H=W=32.
    x2 = jax.random.normal(kx2, (2, 8, 32, 32), jnp.float32).astype(jnp.bfloat16)
    p2 = init_params(kp2, 8, 16)
    out2 = jax.block_until_ready(jax.jit(factorized_reduce)(x2, p2))
    ref2 = factorized_reduce_ref(x2.astype(jnp.float32), p2)
    assert out2.shape == (2, 16, 16, 16)
    assert out2.dtype == jnp.bfloat16
    assert jnp.allclose(out2.astype(jnp.float32), ref2, atol=1.5e-1, rtol=5e-2), \
        float(jnp.max(jnp.abs(out2.astype(jnp.float32) - ref2)))

    # Case 3: f32, multi-step grid (pixel cap forces 2 row tiles), N=2, Cin=16,
    # Cout=32, H=W=32 -> n_rows=32, R=16, grid=(2,).
    x3 = jax.random.normal(kx3, (2, 16, 32, 32), jnp.float32)
    p3 = init_params(kp3, 16, 32)
    fr3 = jax.jit(functools.partial(factorized_reduce, max_tile_pixels=256))
    out3 = jax.block_until_ready(fr3(x3, p3))
    ref3 = factorized_reduce_ref(x3, p3)
    assert out3.shape == (2, 32, 16, 16)
    assert jnp.allclose(out3, ref3, atol=2e-3, rtol=2e-3), \
        float(jnp.max(jnp.abs(out3 - ref3)))

    print("KERNEL_OK")
</pallas_src>

<mosaic_0001>
module attributes {stable_mosaic.version = 11 : i64} {
  func.func @_fr_kernel(%arg0: i32, %arg1: memref<16x2x8x32xf32, #tpu.memory_space<vmem>>, %arg2: memref<32x32xf32, #tpu.memory_space<vmem>>, %arg3: memref<32x32xf32, #tpu.memory_space<vmem>>, %arg4: memref<1x32xf32, #tpu.memory_space<vmem>>, %arg5: memref<16x256xf32, #tpu.memory_space<vmem>>) attributes {dimension_semantics = [#tpu.dimension_semantics<parallel>], iteration_bounds = array<i64: 1>, scalar_prefetch = 0 : i64, scratch_operands = 0 : i64, tpu.core_type = #tpu.core_type<tc>, window_params = [{transform_indices = @transform_0, window_bounds = array<i64: 16, 2, 8, 32>}, {pipeline_mode = #tpu.pipeline_mode<synchronous>, transform_indices = @transform_1, window_bounds = array<i64: 32, 32>}, {pipeline_mode = #tpu.pipeline_mode<synchronous>, transform_indices = @transform_2, window_bounds = array<i64: 32, 32>}, {pipeline_mode = #tpu.pipeline_mode<synchronous>, transform_indices = @transform_3, window_bounds = array<i64: 1, 32>}, {transform_indices = @transform_4, window_bounds = array<i64: 16, 256>}]} {
    %c0 = arith.constant 0 : index
    %c0_0 = arith.constant 0 : index
    %c0_1 = arith.constant 0 : index
    %c0_2 = arith.constant 0 : index
    %0 = vector.load %arg1[%c0, %c0_0, %c0_1, %c0_2] : memref<16x2x8x32xf32, #tpu.memory_space<vmem>>, vector<16x1x8x32xf32>
    %1 = vector.shape_cast %0 : vector<16x1x8x32xf32> to vector<16x8x32xf32>
    %cst = arith.constant 0.000000e+00 : f32
    %2 = vector.broadcast %cst : f32 to vector<16x8x32xf32>
    %3 = arith.maximumf %1, %2 : vector<16x8x32xf32>
    %4 = vector.shape_cast %3 : vector<16x8x32xf32> to vector<128x32xf32>
    %c0_3 = arith.constant 0 : index
    %c1 = arith.constant 1 : index
    %c0_4 = arith.constant 0 : index
    %c0_5 = arith.constant 0 : index
    %5 = vector.load %arg1[%c0_3, %c1, %c0_4, %c0_5] : memref<16x2x8x32xf32, #tpu.memory_space<vmem>>, vector<16x1x8x32xf32>
    %6 = vector.shape_cast %5 : vector<16x1x8x32xf32> to vector<16x8x32xf32>
    %cst_6 = arith.constant 0.000000e+00 : f32
    %7 = vector.broadcast %cst_6 : f32 to vector<16x8x32xf32>
    %8 = arith.maximumf %6, %7 : vector<16x8x32xf32>
    %9 = vector.shape_cast %8 : vector<16x8x32xf32> to vector<128x32xf32>
    %c0_7 = arith.constant 0 : index
    %c0_8 = arith.constant 0 : index
    %10 = vector.load %arg2[%c0_7, %c0_8] : memref<32x32xf32, #tpu.memory_space<vmem>>, vector<32x32xf32>
    %cst_9 = arith.constant dense<0.000000e+00> : vector<128x32xf32>
    %11 = tpu.matmul %4, %10, %cst_9 {dimension_numbers = #tpu.dot_dimension_numbers<[1], [0], [0], [1], [0, 0, 1, 1], [], []>, precision = #tpu.contract_precision<fp32>} : vector<128x32xf32>, vector<32x32xf32>, vector<128x32xf32> -> vector<128x32xf32>
    %c0_10 = arith.constant 0 : index
    %c0_11 = arith.constant 0 : index
    %12 = vector.load %arg3[%c0_10, %c0_11] : memref<32x32xf32, #tpu.memory_space<vmem>>, vector<32x32xf32>
    %cst_12 = arith.constant dense<0.000000e+00> : vector<128x32xf32>
    %13 = tpu.matmul %9, %12, %cst_12 {dimension_numbers = #tpu.dot_dimension_numbers<[1], [0], [0], [1], [0, 0, 1, 1], [], []>, precision = #tpu.contract_precision<fp32>} : vector<128x32xf32>, vector<32x32xf32>, vector<128x32xf32> -> vector<128x32xf32>
    %14 = arith.addf %11, %13 : vector<128x32xf32>
    %c0_13 = arith.constant 0 : index
    %c0_14 = arith.constant 0 : index
    %15 = vector.load %arg4[%c0_13, %c0_14] : memref<1x32xf32, #tpu.memory_space<vmem>>, vector<1x32xf32>
    %16 = vector.broadcast %15 : vector<1x32xf32> to vector<128x32xf32>
    %17 = arith.addf %14, %16 : vector<128x32xf32>
    %18 = vector.shape_cast %17 : vector<128x32xf32> to vector<16x8x32xf32>
    %19 = vector.extract_strided_slice %18 {offsets = [0, 0, 0], sizes = [16, 1, 32], strides = [1, 1, 1]} : vector<16x8x32xf32> to vector<16x1x32xf32>
    %20 = vector.shape_cast %19 : vector<16x1x32xf32> to vector<16x32xf32>
    %c0_15 = arith.constant 0 : index
    %c0_16 = arith.constant 0 : index
    %21 = vector.load %arg5[%c0_15, %c0_16] : memref<16x256xf32, #tpu.memory_space<vmem>>, vector<16x32xf32>
    tpu.vector_store %arg5[%c0_15, %c0_16], %20 {strides = array<i32>} : memref<16x256xf32, #tpu.memory_space<vmem>>, vector<16x32xf32>,
    %22 = vector.extract_strided_slice %18 {offsets = [0, 1, 0], sizes = [16, 1, 32], strides = [1, 1, 1]} : vector<16x8x32xf32> to vector<16x1x32xf32>
    %23 = vector.shape_cast %22 : vector<16x1x32xf32> to vector<16x32xf32>
    %c0_17 = arith.constant 0 : index
    %c32 = arith.constant 32 : index
    %24 = vector.load %arg5[%c0_17, %c32] : memref<16x256xf32, #tpu.memory_space<vmem>>, vector<16x32xf32>
    tpu.vector_store %arg5[%c0_17, %c32], %23 {strides = array<i32>} : memref<16x256xf32, #tpu.memory_space<vmem>>, vector<16x32xf32>,
    %25 = vector.extract_strided_slice %18 {offsets = [0, 2, 0], sizes = [16, 1, 32], strides = [1, 1, 1]} : vector<16x8x32xf32> to vector<16x1x32xf32>
    %26 = vector.shape_cast %25 : vector<16x1x32xf32> to vector<16x32xf32>
    %c0_18 = arith.constant 0 : index
    %c64 = arith.constant 64 : index
    %27 = vector.load %arg5[%c0_18, %c64] : memref<16x256xf32, #tpu.memory_space<vmem>>, vector<16x32xf32>
    tpu.vector_store %arg5[%c0_18, %c64], %26 {strides = array<i32>} : memref<16x256xf32, #tpu.memory_space<vmem>>, vector<16x32xf32>,
    %28 = vector.extract_strided_slice %18 {offsets = [0, 3, 0], sizes = [16, 1, 32], strides = [1, 1, 1]} : vector<16x8x32xf32> to vector<16x1x32xf32>
    %29 = vector.shape_cast %28 : vector<16x1x32xf32> to vector<16x32xf32>
    %c0_19 = arith.constant 0 : index
    %c96 = arith.constant 96 : index
    %30 = vector.load %arg5[%c0_19, %c96] : memref<16x256xf32, #tpu.memory_space<vmem>>, vector<16x32xf32>
    tpu.vector_store %arg5[%c0_19, %c96], %29 {strides = array<i32>} : memref<16x256xf32, #tpu.memory_space<vmem>>, vector<16x32xf32>,
    %31 = vector.extract_strided_slice %18 {offsets = [0, 4, 0], sizes = [16, 1, 32], strides = [1, 1, 1]} : vector<16x8x32xf32> to vector<16x1x32xf32>
    %32 = vector.shape_cast %31 : vector<16x1x32xf32> to vector<16x32xf32>
    %c0_20 = arith.constant 0 : index
    %c128 = arith.constant 128 : index
    %33 = vector.load %arg5[%c0_20, %c128] : memref<16x256xf32, #tpu.memory_space<vmem>>, vector<16x32xf32>
    tpu.vector_store %arg5[%c0_20, %c128], %32 {strides = array<i32>} : memref<16x256xf32, #tpu.memory_space<vmem>>, vector<16x32xf32>,
    %34 = vector.extract_strided_slice %18 {offsets = [0, 5, 0], sizes = [16, 1, 32], strides = [1, 1, 1]} : vector<16x8x32xf32> to vector<16x1x32xf32>
    %35 = vector.shape_cast %34 : vector<16x1x32xf32> to vector<16x32xf32>
    %c0_21 = arith.constant 0 : index
    %c160 = arith.constant 160 : index
    %36 = vector.load %arg5[%c0_21, %c160] : memref<16x256xf32, #tpu.memory_space<vmem>>, vector<16x32xf32>
    tpu.vector_store %arg5[%c0_21, %c160], %35 {strides = array<i32>} : memref<16x256xf32, #tpu.memory_space<vmem>>, vector<16x32xf32>,
    %37 = vector.extract_strided_slice %18 {offsets = [0, 6, 0], sizes = [16, 1, 32], strides = [1, 1, 1]} : vector<16x8x32xf32> to vector<16x1x32xf32>
    %38 = vector.shape_cast %37 : vector<16x1x32xf32> to vector<16x32xf32>
    %c0_22 = arith.constant 0 : index
    %c192 = arith.constant 192 : index
    %39 = vector.load %arg5[%c0_22, %c192] : memref<16x256xf32, #tpu.memory_space<vmem>>, vector<16x32xf32>
    tpu.vector_store %arg5[%c0_22, %c192], %38 {strides = array<i32>} : memref<16x256xf32, #tpu.memory_space<vmem>>, vector<16x32xf32>,
    %40 = vector.extract_strided_slice %18 {offsets = [0, 7, 0], sizes = [16, 1, 32], strides = [1, 1, 1]} : vector<16x8x32xf32> to vector<16x1x32xf32>
    %41 = vector.shape_cast %40 : vector<16x1x32xf32> to vector<16x32xf32>
    %c0_23 = arith.constant 0 : index
    %c224 = arith.constant 224 : index
    %42 = vector.load %arg5[%c0_23, %c224] : memref<16x256xf32, #tpu.memory_space<vmem>>, vector<16x32xf32>
    tpu.vector_store %arg5[%c0_23, %c224], %41 {strides = array<i32>} : memref<16x256xf32, #tpu.memory_space<vmem>>, vector<16x32xf32>,
    return
  }
  func.func @transform_0(%arg0: i32) -> (i32, i32, i32, i32) {
    %c0_i32 = arith.constant 0 : i32
    %c0_i32_0 = arith.constant 0 : i32
    %c0_i32_1 = arith.constant 0 : i32
    %c0_i32_2 = arith.constant 0 : i32
    return %arg0, %c0_i32, %c0_i32_0, %c0_i32_1 : i32, i32, i32, i32
  }
  func.func @transform_1(%arg0: i32) -> (i32, i32) {
    %c0_i32 = arith.constant 0 : i32
    %c0_i32_0 = arith.constant 0 : i32
    %c0_i32_1 = arith.constant 0 : i32
    return %c0_i32, %c0_i32_0 : i32, i32
  }
  func.func @transform_2(%arg0: i32) -> (i32, i32) {
    %c0_i32 = arith.constant 0 : i32
    %c0_i32_0 = arith.constant 0 : i32
    %c0_i32_1 = arith.constant 0 : i32
    return %c0_i32, %c0_i32_0 : i32, i32
  }
  func.func @transform_3(%arg0: i32) -> (i32, i32) {
    %c0_i32 = arith.constant 0 : i32
    %c0_i32_0 = arith.constant 0 : i32
    %c0_i32_1 = arith.constant 0 : i32
    return %c0_i32, %c0_i32_0 : i32, i32
  }
  func.func @transform_4(%arg0: i32) -> (i32, i32) {
    %c0_i32 = arith.constant 0 : i32
    %c0_i32_0 = arith.constant 0 : i32
    return %arg0, %c0_i32 : i32, i32
  }
}

</mosaic_0001>

<llo_original>
// kernel: factorized_reduce.1
$region0: #{factorized_reduce.1}
  #allocation0 [shape = 'u32[]', space=smem, size = 0x4, offset = 0x4, fixed_abs, tag = 'smem constant byte address 0x4 - core index']
  #allocation1 [shape = 'u32[144,128]{1,0:T(1,128)}', space=vmem, size = 0x12000, scoped, tag = 'internal scratch']
  %s0 = inlined_call_operand.vmem [shape: f32[16,2,8,32], index: 0, kind: input, shape index: {}]
  %s1 = inlined_call_operand.vmem [shape: f32[32,32], index: 1, kind: input, shape index: {}]
  %s2 = inlined_call_operand.vmem [shape: f32[32,32], index: 2, kind: input, shape index: {}]
  %s3 = inlined_call_operand.vmem [shape: f32[1,32], index: 3, kind: input, shape index: {}]
  %s4 = inlined_call_operand.vmem [shape: f32[16,256], index: 4, kind: output, shape index: {}]
  %s5 = sld [smem:[#allocation0]]
  $region26: #{factorized_reduce.1} parent=0
    _
  %s7 = ssub.s32 1, %s5
  %s8 = scalar_select 0, %s7, %s5
  // Predicated region
  $region2: #{factorized_reduce.1} parent=0 // pred_check
    _
  $region3: #{factorized_reduce.1} parent=0 // pred_check_branch
    %10 = sbr.rel (0) target = $region5
  $region4: #{factorized_reduce.1} parent=0 // pred_region
    _
  $region5: #{factorized_reduce.1} parent=0 // pred_fallthru
    _
  // Predicated region
  $region6: #{factorized_reduce.1} parent=0 // pred_check
    _
  $region7: #{factorized_reduce.1} parent=0 // pred_check_branch
    %12 = sbr.rel (0) target = $region9
  $region8: #{factorized_reduce.1} parent=0 // pred_region
    _
  $region9: #{factorized_reduce.1} parent=0 // pred_fallthru
    _
  // Predicated region
  $region10: #{factorized_reduce.1} parent=0 // pred_check
    _
  $region11: #{factorized_reduce.1} parent=0 // pred_check_branch
    %14 = sbr.rel (0) target = $region13
  $region12: #{factorized_reduce.1} parent=0 // pred_region
    _
  $region13: #{factorized_reduce.1} parent=0 // pred_fallthru
    _
  // Predicated region
  $region14: #{factorized_reduce.1} parent=0 // pred_check
    _
  $region15: #{factorized_reduce.1} parent=0 // pred_check_branch
    %16 = sbr.rel (0) target = $region17
  $region16: #{factorized_reduce.1} parent=0 // pred_region
    _
  $region17: #{factorized_reduce.1} parent=0 // pred_fallthru
    _
  %v17 = vld [vmem:[%s0] sm:$0xff]
  %v18 = vld [vmem:[%s0 + $0x10] sm:$0xff]
  %v19 = vld [vmem:[%s0 + $0x20] sm:$0xff]
  %v20 = vld [vmem:[%s0 + $0x30] sm:$0xff]
  %v21 = vld [vmem:[%s0 + $0x40] sm:$0xff]
  %v22 = vld [vmem:[%s0 + $0x50] sm:$0xff]
  %v23 = vld [vmem:[%s0 + $0x60] sm:$0xff]
  %v24 = vld [vmem:[%s0 + $0x70] sm:$0xff]
  %v25 = vld [vmem:[%s0 + $0x80] sm:$0xff]
  %v26 = vld [vmem:[%s0 + $0x90] sm:$0xff]
  %v27 = vld [vmem:[%s0 + $0xa0] sm:$0xff]
  %v28 = vld [vmem:[%s0 + $0xb0] sm:$0xff]
  %v29 = vld [vmem:[%s0 + $0xc0] sm:$0xff]
  %v30 = vld [vmem:[%s0 + $0xd0] sm:$0xff]
  %v31 = vld [vmem:[%s0 + $0xe0] sm:$0xff]
  %v32 = vld [vmem:[%s0 + $0xf0] sm:$0xff]
  %v33 = vmax.f32 %v17, 0.0
  %v34 = vmax.f32 %v18, 0.0
  %v35 = vmax.f32 %v19, 0.0
  %v36 = vmax.f32 %v20, 0.0
  %v37 = vmax.f32 %v21, 0.0
  %v38 = vmax.f32 %v22, 0.0
  %v39 = vmax.f32 %v23, 0.0
  %v40 = vmax.f32 %v24, 0.0
  %v41 = vmax.f32 %v25, 0.0
  %v42 = vmax.f32 %v26, 0.0
  %v43 = vmax.f32 %v27, 0.0
  %v44 = vmax.f32 %v28, 0.0
  %v45 = vmax.f32 %v29, 0.0
  %v46 = vmax.f32 %v30, 0.0
  %v47 = vmax.f32 %v31, 0.0
  %v48 = vmax.f32 %v32, 0.0
  %s49 = scalar_lea.vmem %s0, 8
  %v50 = vld [vmem:[%s49] sm:$0xff]
  %v51 = vld [vmem:[%s49 + $0x10] sm:$0xff]
  %v52 = vld [vmem:[%s49 + $0x20] sm:$0xff]
  %v53 = vld [vmem:[%s49 + $0x30] sm:$0xff]
  %v54 = vld [vmem:[%s49 + $0x40] sm:$0xff]
  %v55 = vld [vmem:[%s49 + $0x50] sm:$0xff]
  %v56 = vld [vmem:[%s49 + $0x60] sm:$0xff]
  %v57 = vld [vmem:[%s49 + $0x70] sm:$0xff]
  %v58 = vld [vmem:[%s49 + $0x80] sm:$0xff]
  %v59 = vld [vmem:[%s49 + $0x90] sm:$0xff]
  %v60 = vld [vmem:[%s49 + $0xa0] sm:$0xff]
  %v61 = vld [vmem:[%s49 + $0xb0] sm:$0xff]
  %v62 = vld [vmem:[%s49 + $0xc0] sm:$0xff]
  %v63 = vld [vmem:[%s49 + $0xd0] sm:$0xff]
  %v64 = vld [vmem:[%s49 + $0xe0] sm:$0xff]
  %v65 = vld [vmem:[%s49 + $0xf0] sm:$0xff]
  %v66 = vmax.f32 %v50, 0.0
  %v67 = vmax.f32 %v51, 0.0
  %v68 = vmax.f32 %v52, 0.0
  %v69 = vmax.f32 %v53, 0.0
  %v70 = vmax.f32 %v54, 0.0
  %v71 = vmax.f32 %v55, 0.0
  %v72 = vmax.f32 %v56, 0.0
  %v73 = vmax.f32 %v57, 0.0
  %v74 = vmax.f32 %v58, 0.0
  %v75 = vmax.f32 %v59, 0.0
  %v76 = vmax.f32 %v60, 0.0
  %v77 = vmax.f32 %v61, 0.0
  %v78 = vmax.f32 %v62, 0.0
  %v79 = vmax.f32 %v63, 0.0
  %v80 = vmax.f32 %v64, 0.0
  %v81 = vmax.f32 %v65, 0.0
  %v82 = vld [vmem:[%s1] sm:$0xff]
  %v83 = vld [vmem:[%s1 + $0x8] sm:$0xff]
  %v84 = vld [vmem:[%s1 + $0x10] sm:$0xff]
  %v85 = vld [vmem:[%s1 + $0x18] sm:$0xff]
  %v86 = vld [vmem:[%s2] sm:$0xff]
  %v87 = vld [vmem:[%s2 + $0x8] sm:$0xff]
  %v88 = vld [vmem:[%s2 + $0x10] sm:$0xff]
  %v89 = vld [vmem:[%s2 + $0x18] sm:$0xff]
  %vm90 = vcmask 261120
  %v92 = vsel %vm90, %v66, 0
  %v95 = vsel %vm90, %v67, 0
  %v98 = vsel %vm90, %v68, 0
  %v101 = vsel %vm90, %v69, 0
  %v104 = vsel %vm90, %v70, 0
  %v107 = vsel %vm90, %v71, 0
  %v110 = vsel %vm90, %v72, 0
  %v113 = vsel %vm90, %v73, 0
  %v116 = vsel %vm90, %v74, 0
  %v119 = vsel %vm90, %v75, 0
  %v122 = vsel %vm90, %v76, 0
  %v125 = vsel %vm90, %v77, 0
  %v128 = vsel %vm90, %v78, 0
  %v131 = vsel %vm90, %v79, 0
  %v134 = vsel %vm90, %v80, 0
  %v137 = vsel %vm90, %v81, 0
  %139 = vmatprep.subr.mxu0 0.0
  %140 = vmatpush1.msra.mxu0 0.0
  %141 = vmatprep.subr.mxu0 0.0
  %142 = vmatpush1.msra.mxu0 0.0
  %143 = vmatprep.subr.mxu0 0.0
  %144 = vmatpush1.msra.mxu0 0.0
  %145 = vmatprep.subr.mxu0 0.0
  %146 = vmatpush1.msra.mxu0 0.0
  %147 = vmatprep.subr.mxu0 0.0
  %148 = vmatpush1.msra.mxu0 0.0
  %149 = vmatprep.subr.mxu0 0.0
  %150 = vmatpush1.msra.mxu0 0.0
  %151 = vmatprep.subr.mxu0 0.0
  %152 = vmatpush1.msra.mxu0 0.0
  %153 = vmatprep.subr.mxu0 0.0
  %154 = vmatpush1.msra.mxu0 0.0
  %155 = vmatprep.subr.mxu0 0.0
  %156 = vmatpush1.msra.mxu0 0.0
  %157 = vmatprep.subr.mxu0 0.0
  %158 = vmatpush1.msra.mxu0 0.0
  %159 = vmatprep.subr.mxu0 0.0
  %160 = vmatpush1.msra.mxu0 0.0
  %161 = vmatprep.subr.mxu0 0.0
  %162 = vmatpush1.msra.mxu0 0.0
  %163 = vmatprep.subr.mxu0 0.0
  %v164 = vand.u32 %v89, 4294901760
  %165 = vmatpush1.msra.mxu0 %v164
  %166 = vmatprep.subr.mxu0 0.0
  %v167 = vand.u32 %v88, 4294901760
  %168 = vmatpush1.msra.mxu0 %v167
  %169 = vmatprep.subr.mxu0 0.0
  %v170 = vand.u32 %v87, 4294901760
  %171 = vmatpush1.msra.mxu0 %v170
  %172 = vmatprep.subr.mxu0 0.0
  %v173 = vand.u32 %v86, 4294901760
  %174 = vmatpush1.msra.mxu0 %v173
  %175 = vmatprep.subr.mxu0 0.0
  %176 = vmatpush2.msra.mxu0 0.0
  %177 = vmatprep.subr.mxu0 0.0
  %178 = vmatpush2.msra.mxu0 0.0
  %179 = vmatprep.subr.mxu0 0.0
  %180 = vmatpush2.msra.mxu0 0.0
  %181 = vmatprep.subr.mxu0 0.0
  %182 = vmatpush2.msra.mxu0 0.0
  %183 = vmatprep.subr.mxu0 0.0
  %184 = vmatpush2.msra.mxu0 0.0
  %185 = vmatprep.subr.mxu0 0.0
  %186 = vmatpush2.msra.mxu0 0.0
  %187 = vmatprep.subr.mxu0 0.0
  %188 = vmatpush2.msra.mxu0 0.0
  %189 = vmatprep.subr.mxu0 0.0
  %190 = vmatpush2.msra.mxu0 0.0
  %191 = vmatprep.subr.mxu0 0.0
  %192 = vmatpush2.msra.mxu0 0.0
  %193 = vmatprep.subr.mxu0 0.0
  %194 = vmatpush2.msra.mxu0 0.0
  %195 = vmatprep.subr.mxu0 0.0
  %196 = vmatpush2.msra.mxu0 0.0
  %197 = vmatprep.subr.mxu0 0.0
  %198 = vmatpush2.msra.mxu0 0.0
  %199 = vmatprep.subr.mxu0 0.0
  %200 = vmatpush2.msra.mxu0 0.0
  %201 = vmatprep.subr.mxu0 0.0
  %202 = vmatpush2.msra.mxu0 0.0
  %203 = vmatprep.subr.mxu0 0.0
  %204 = vmatpush2.msra.mxu0 0.0
  %205 = vmatprep.subr.mxu0 0.0
  %206 = vmatpush2.msra.mxu0 0.0
  %207 = vmatprep.mubr.f32.mxu0 0.0
  %v208 = vand.u32 %v92, 4294901760
  %v209 = vsub.f32 %v92, %v208
  %v210 = vand.u32 %v209, 4294901760
  %v211 = vsub.f32 %v209, %v210
  %v212 = vand.u32 %v211, 4294901760
  %213 = vmatmul.mubr.f32.gmra.mxu0 %v212
  %v214 = vpop.f32.mrf.mxu0
  %v215 = vadd.f32 0.0, %v214
  %v216 = vpop.f32.mrf.mxu0
  %217 = vmatprep.mubr.f32.mxu0 0.0
  %v218 = vand.u32 %v95, 4294901760
  %v219 = vsub.f32 %v95, %v218
  %v220 = vand.u32 %v219, 4294901760
  %v221 = vsub.f32 %v219, %v220
  %v222 = vand.u32 %v221, 4294901760
  %223 = vmatmul.mubr.f32.gmra.mxu0 %v222
  %v224 = vpop.f32.mrf.mxu0
  %v225 = vadd.f32 0.0, %v224
  %v226 = vpop.f32.mrf.mxu0
  %227 = vmatprep.mubr.f32.mxu0 0.0
  %v228 = vand.u32 %v98, 4294901760
  %v229 = vsub.f32 %v98, %v228
  %v230 = vand.u32 %v229, 4294901760
  %v231 = vsub.f32 %v229, %v230
  %v232 = vand.u32 %v231, 4294901760
  %233 = vmatmul.mubr.f32.gmra.mxu0 %v232
  %v234 = vpop.f32.mrf.mxu0
  %v235 = vadd.f32 0.0, %v234
  %v236 = vpop.f32.mrf.mxu0
  %237 = vmatprep.mubr.f32.mxu0 0.0
  %v238 = vand.u32 %v101, 4294901760
  %v239 = vsub.f32 %v101, %v238
  %v240 = vand.u32 %v239, 4294901760
  %v241 = vsub.f32 %v239, %v240
  %v242 = vand.u32 %v241, 4294901760
  %243 = vmatmul.mubr.f32.gmra.mxu0 %v242
  %v244 = vpop.f32.mrf.mxu0
  %v245 = vadd.f32 0.0, %v244
  %v246 = vpop.f32.mrf.mxu0
  %247 = vmatprep.mubr.f32.mxu0 0.0
  %v248 = vand.u32 %v104, 4294901760
  %v249 = vsub.f32 %v104, %v248
  %v250 = vand.u32 %v249, 4294901760
  %v251 = vsub.f32 %v249, %v250
  %v252 = vand.u32 %v251, 4294901760
  %253 = vmatmul.mubr.f32.gmra.mxu0 %v252
  %v254 = vpop.f32.mrf.mxu0
  %v255 = vadd.f32 0.0, %v254
  %v256 = vpop.f32.mrf.mxu0
  %257 = vmatprep.mubr.f32.mxu0 0.0
  %v258 = vand.u32 %v107, 4294901760
  %v259 = vsub.f32 %v107, %v258
  %v260 = vand.u32 %v259, 4294901760
  %v261 = vsub.f32 %v259, %v260
  %v262 = vand.u32 %v261, 4294901760
  %263 = vmatmul.mubr.f32.gmra.mxu0 %v262
  %v264 = vpop.f32.mrf.mxu0
  %v265 = vadd.f32 0.0, %v264
  %v266 = vpop.f32.mrf.mxu0
  %267 = vmatprep.mubr.f32.mxu0 0.0
  %v268 = vand.u32 %v110, 4294901760
  %v269 = vsub.f32 %v110, %v268
  %v270 = vand.u32 %v269, 4294901760
  %v271 = vsub.f32 %v269, %v270
  %v272 = vand.u32 %v271, 4294901760
  %273 = vmatmul.mubr.f32.gmra.mxu0 %v272
  %v274 = vpop.f32.mrf.mxu0
  %v275 = vadd.f32 0.0, %v274
  %v276 = vpop.f32.mrf.mxu0
  %277 = vmatprep.mubr.f32.mxu0 0.0
  %v278 = vand.u32 %v113, 4294901760
  %v279 = vsub.f32 %v113, %v278
  %v280 = vand.u32 %v279, 4294901760
  %v281 = vsub.f32 %v279, %v280
  %v282 = vand.u32 %v281, 4294901760
  %283 = vmatmul.mubr.f32.gmra.mxu0 %v282
  %v284 = vpop.f32.mrf.mxu0
  %v285 = vadd.f32 0.0, %v284
  %v286 = vpop.f32.mrf.mxu0
  %287 = vmatprep.mubr.f32.mxu0 0.0
  %v288 = vand.u32 %v116, 4294901760
  %v289 = vsub.f32 %v116, %v288
  %v290 = vand.u32 %v289, 4294901760
  %v291 = vsub.f32 %v289, %v290
  %v292 = vand.u32 %v291, 4294901760
  %293 = vmatmul.mubr.f32.gmra.mxu0 %v292
  %v294 = vpop.f32.mrf.mxu0
  %v295 = vadd.f32 0.0, %v294
  %v296 = vpop.f32.mrf.mxu0
  %297 = vmatprep.mubr.f32.mxu0 0.0
  %v298 = vand.u32 %v119, 4294901760
  %v299 = vsub.f32 %v119, %v298
  %v300 = vand.u32 %v299, 4294901760
  %v301 = vsub.f32 %v299, %v300
  %v302 = vand.u32 %v301, 4294901760
  %303 = vmatmul.mubr.f32.gmra.mxu0 %v302
  %v304 = vpop.f32.mrf.mxu0
  %v305 = vadd.f32 0.0, %v304
  %v306 = vpop.f32.mrf.mxu0
  %307 = vmatprep.mubr.f32.mxu0 0.0
  %v308 = vand.u32 %v122, 4294901760
  %v309 = vsub.f32 %v122, %v308
  %v310 = vand.u32 %v309, 4294901760
  %v311 = vsub.f32 %v309, %v310
  %v312 = vand.u32 %v311, 4294901760
  %313 = vmatmul.mubr.f32.gmra.mxu0 %v312
  %v314 = vpop.f32.mrf.mxu0
  %v315 = vadd.f32 0.0, %v314
  %v316 = vpop.f32.mrf.mxu0
  %317 = vmatprep.mubr.f32.mxu0 0.0
  %v318 = vand.u32 %v125, 4294901760
  %v319 = vsub.f32 %v125, %v318
  %v320 = vand.u32 %v319, 4294901760
  %v321 = vsub.f32 %v319, %v320
  %v322 = vand.u32 %v321, 4294901760
  %323 = vmatmul.mubr.f32.gmra.mxu0 %v322
  %v324 = vpop.f32.mrf.mxu0
  %v325 = vadd.f32 0.0, %v324
  %v326 = vpop.f32.mrf.mxu0
  %327 = vmatprep.mubr.f32.mxu0 0.0
  %v328 = vand.u32 %v128, 4294901760
  %v329 = vsub.f32 %v128, %v328
  %v330 = vand.u32 %v329, 4294901760
  %v331 = vsub.f32 %v329, %v330
  %v332 = vand.u32 %v331, 4294901760
  %333 = vmatmul.mubr.f32.gmra.mxu0 %v332
  %v334 = vpop.f32.mrf.mxu0
  %v335 = vadd.f32 0.0, %v334
  %v336 = vpop.f32.mrf.mxu0
  %337 = vmatprep.mubr.f32.mxu0 0.0
  %v338 = vand.u32 %v131, 4294901760
  %v339 = vsub.f32 %v131, %v338
  %v340 = vand.u32 %v339, 4294901760
  %v341 = vsub.f32 %v339, %v340
  %v342 = vand.u32 %v341, 4294901760
  %343 = vmatmul.mubr.f32.gmra.mxu0 %v342
  %v344 = vpop.f32.mrf.mxu0
  %v345 = vadd.f32 0.0, %v344
  %v346 = vpop.f32.mrf.mxu0
  %347 = vmatprep.mubr.f32.mxu0 0.0
  %v348 = vand.u32 %v134, 4294901760
  %v349 = vsub.f32 %v134, %v348
  %v350 = vand.u32 %v349, 4294901760
  %v351 = vsub.f32 %v349, %v350
  %v352 = vand.u32 %v351, 4294901760
  %353 = vmatmul.mubr.f32.gmra.mxu0 %v352
  %v354 = vpop.f32.mrf.mxu0
  %v355 = vadd.f32 0.0, %v354
  %v356 = vpop.f32.mrf.mxu0
  %357 = vmatprep.mubr.f32.mxu0 0.0
  %v358 = vand.u32 %v137, 4294901760
  %v359 = vsub.f32 %v137, %v358
  %v360 = vand.u32 %v359, 4294901760
  %v361 = vsub.f32 %v359, %v360
  %v362 = vand.u32 %v361, 4294901760
  %363 = vmatmul.mubr.f32.gmra.mxu0 %v362
  %v364 = vpop.f32.mrf.mxu0
  %v365 = vadd.f32 0.0, %v364
  %v366 = vpop.f32.mrf.mxu0
  %367 = vdwg.mxu0
  %368 = vmatprep.subr.mxu0 0.0
  %369 = vmatpush1.msra.mxu0 0.0
  %370 = vmatprep.subr.mxu0 0.0
  %371 = vmatpush1.msra.mxu0 0.0
  %372 = vmatprep.subr.mxu0 0.0
  %373 = vmatpush1.msra.mxu0 0.0
  %374 = vmatprep.subr.mxu0 0.0
  %375 = vmatpush1.msra.mxu0 0.0
  %376 = vmatprep.subr.mxu0 0.0
  %377 = vmatpush1.msra.mxu0 0.0
  %378 = vmatprep.subr.mxu0 0.0
  %379 = vmatpush1.msra.mxu0 0.0
  %380 = vmatprep.subr.mxu0 0.0
  %381 = vmatpush1.msra.mxu0 0.0
  %382 = vmatprep.subr.mxu0 0.0
  %383 = vmatpush1.msra.mxu0 0.0
  %384 = vmatprep.subr.mxu0 0.0
  %385 = vmatpush1.msra.mxu0 0.0
  %386 = vmatprep.subr.mxu0 0.0
  %387 = vmatpush1.msra.mxu0 0.0
  %388 = vmatprep.subr.mxu0 0.0
  %389 = vmatpush1.msra.mxu0 0.0
  %390 = vmatprep.subr.mxu0 0.0
  %391 = vmatpush1.msra.mxu0 0.0
  %392 = vmatprep.subr.mxu0 0.0
  %v393 = vand.u32 %v89, 4294901760
  %v394 = vsub.f32 %v89, %v393
  %v395 = vand.u32 %v394, 4294901760
  %v396 = vsub.f32 %v394, %v395
  %v397 = vand.u32 %v396, 4294901760
  %398 = vmatpush1.msra.mxu0 %v397
  %399 = vmatprep.subr.mxu0 0.0
  %v400 = vand.u32 %v88, 4294901760
  %v401 = vsub.f32 %v88, %v400
  %v402 = vand.u32 %v401, 4294901760
  %v403 = vsub.f32 %v401, %v402
  %v404 = vand.u32 %v403, 4294901760
  %405 = vmatpush1.msra.mxu0 %v404
  %406 = vmatprep.subr.mxu0 0.0
  %v407 = vand.u32 %v87, 4294901760
  %v408 = vsub.f32 %v87, %v407
  %v409 = vand.u32 %v408, 4294901760
  %v410 = vsub.f32 %v408, %v409
  %v411 = vand.u32 %v410, 4294901760
  %412 = vmatpush1.msra.mxu0 %v411
  %413 = vmatprep.subr.mxu0 0.0
  %v414 = vand.u32 %v86, 4294901760
  %v415 = vsub.f32 %v86, %v414
  %v416 = vand.u32 %v415, 4294901760
  %v417 = vsub.f32 %v415, %v416
  %v418 = vand.u32 %v417, 4294901760
  %419 = vmatpush1.msra.mxu0 %v418
  %420 = vmatprep.subr.mxu0 0.0
  %421 = vmatpush2.msra.mxu0 0.0
  %422 = vmatprep.subr.mxu0 0.0
  %423 = vmatpush2.msra.mxu0 0.0
  %424 = vmatprep.subr.mxu0 0.0
  %425 = vmatpush2.msra.mxu0 0.0
  %426 = vmatprep.subr.mxu0 0.0
  %427 = vmatpush2.msra.mxu0 0.0
  %428 = vmatprep.subr.mxu0 0.0
  %429 = vmatpush2.msra.mxu0 0.0
  %430 = vmatprep.subr.mxu0 0.0
  %431 = vmatpush2.msra.mxu0 0.0
  %432 = vmatprep.subr.mxu0 0.0
  %433 = vmatpush2.msra.mxu0 0.0
  %434 = vmatprep.subr.mxu0 0.0
  %435 = vmatpush2.msra.mxu0 0.0
  %436 = vmatprep.subr.mxu0 0.0
  %437 = vmatpush2.msra.mxu0 0.0
  %438 = vmatprep.subr.mxu0 0.0
  %439 = vmatpush2.msra.mxu0 0.0
  %440 = vmatprep.subr.mxu0 0.0
  %441 = vmatpush2.msra.mxu0 0.0
  %442 = vmatprep.subr.mxu0 0.0
  %443 = vmatpush2.msra.mxu0 0.0
  %444 = vmatprep.subr.mxu0 0.0
  %445 = vmatpush2.msra.mxu0 0.0
  %446 = vmatprep.subr.mxu0 0.0
  %447 = vmatpush2.msra.mxu0 0.0
  %448 = vmatprep.subr.mxu0 0.0
  %449 = vmatpush2.msra.mxu0 0.0
  %450 = vmatprep.subr.mxu0 0.0
  %451 = vmatpush2.msra.mxu0 0.0
  %452 = vmatprep.mubr.f32.mxu0 0.0
  %v453 = vand.u32 %v92, 4294901760
  %454 = vmatmul.mubr.f32.gmra.mxu0 %v453
  %v455 = vpop.f32.mrf.mxu0
  %v456 = vadd.f32 %v215, %v455
  %v457 = vpop.f32.mrf.mxu0
  %458 = vmatprep.mubr.f32.mxu0 0.0
  %v459 = vand.u32 %v95, 4294901760
  %460 = vmatmul.mubr.f32.gmra.mxu0 %v459
  %v461 = vpop.f32.mrf.mxu0
  %v462 = vadd.f32 %v225, %v461
  %v463 = vpop.f32.mrf.mxu0
  %464 = vmatprep.mubr.f32.mxu0 0.0
  %v465 = vand.u32 %v98, 4294901760
  %466 = vmatmul.mubr.f32.gmra.mxu0 %v465
  %v467 = vpop.f32.mrf.mxu0
  %v468 = vadd.f32 %v235, %v467
  %v469 = vpop.f32.mrf.mxu0
  %470 = vmatprep.mubr.f32.mxu0 0.0
  %v471 = vand.u32 %v101, 4294901760
  %472 = vmatmul.mubr.f32.gmra.mxu0 %v471
  %v473 = vpop.f32.mrf.mxu0
  %v474 = vadd.f32 %v245, %v473
  %v475 = vpop.f32.mrf.mxu0
  %476 = vmatprep.mubr.f32.mxu0 0.0
  %v477 = vand.u32 %v104, 4294901760
  %478 = vmatmul.mubr.f32.gmra.mxu0 %v477
  %v479 = vpop.f32.mrf.mxu0
  %v480 = vadd.f32 %v255, %v479
  %v481 = vpop.f32.mrf.mxu0
  %482 = vmatprep.mubr.f32.mxu0 0.0
  %v483 = vand.u32 %v107, 4294901760
  %484 = vmatmul.mubr.f32.gmra.mxu0 %v483
  %v485 = vpop.f32.mrf.mxu0
  %v486 = vadd.f32 %v265, %v485
  %v487 = vpop.f32.mrf.mxu0
  %488 = vmatprep.mubr.f32.mxu0 0.0
  %v489 = vand.u32 %v110, 4294901760
  %490 = vmatmul.mubr.f32.gmra.mxu0 %v489
  %v491 = vpop.f32.mrf.mxu0
  %v492 = vadd.f32 %v275, %v491
  %v493 = vpop.f32.mrf.mxu0
  %494 = vmatprep.mubr.f32.mxu0 0.0
  %v495 = vand.u32 %v113, 4294901760
  %496 = vmatmul.mubr.f32.gmra.mxu0 %v495
  %v497 = vpop.f32.mrf.mxu0
  %v498 = vadd.f32 %v285, %v497
  %v499 = vpop.f32.mrf.mxu0
  %500 = vmatprep.mubr.f32.mxu0 0.0
  %v501 = vand.u32 %v116, 4294901760
  %502 = vmatmul.mubr.f32.gmra.mxu0 %v501
  %v503 = vpop.f32.mrf.mxu0
  %v504 = vadd.f32 %v295, %v503
  %v505 = vpop.f32.mrf.mxu0
  %506 = vmatprep.mubr.f32.mxu0 0.0
  %v507 = vand.u32 %v119, 4294901760
  %508 = vmatmul.mubr.f32.gmra.mxu0 %v507
  %v509 = vpop.f32.mrf.mxu0
  %v510 = vadd.f32 %v305, %v509
  %v511 = vpop.f32.mrf.mxu0
  %512 = vmatprep.mubr.f32.mxu0 0.0
  %v513 = vand.u32 %v122, 4294901760
  %514 = vmatmul.mubr.f32.gmra.mxu0 %v513
  %v515 = vpop.f32.mrf.mxu0
  %v516 = vadd.f32 %v315, %v515
  %v517 = vpop.f32.mrf.mxu0
  %518 = vmatprep.mubr.f32.mxu0 0.0
  %v519 = vand.u32 %v125, 4294901760
  %520 = vmatmul.mubr.f32.gmra.mxu0 %v519
  %v521 = vpop.f32.mrf.mxu0
  %v522 = vadd.f32 %v325, %v521
  %v523 = vpop.f32.mrf.mxu0
  %524 = vmatprep.mubr.f32.mxu0 0.0
  %v525 = vand.u32 %v128, 4294901760
  %526 = vmatmul.mubr.f32.gmra.mxu0 %v525
  %v527 = vpop.f32.mrf.mxu0
  %v528 = vadd.f32 %v335, %v527
  %v529 = vpop.f32.mrf.mxu0
  %530 = vmatprep.mubr.f32.mxu0 0.0
  %v531 = vand.u32 %v131, 4294901760
  %532 = vmatmul.mubr.f32.gmra.mxu0 %v531
  %v533 = vpop.f32.mrf.mxu0
  %v534 = vadd.f32 %v345, %v533
  %v535 = vpop.f32.mrf.mxu0
  %536 = vmatprep.mubr.f32.mxu0 0.0
  %v537 = vand.u32 %v134, 4294901760
  %538 = vmatmul.mubr.f32.gmra.mxu0 %v537
  %v539 = vpop.f32.mrf.mxu0
  %v540 = vadd.f32 %v355, %v539
  %v541 = vpop.f32.mrf.mxu0
  %542 = vmatprep.mubr.f32.mxu0 0.0
  %v543 = vand.u32 %v137, 4294901760
  %544 = vmatmul.mubr.f32.gmra.mxu0 %v543
  %v545 = vpop.f32.mrf.mxu0
  %v546 = vadd.f32 %v365, %v545
  %v547 = vpop.f32.mrf.mxu0
  %548 = vdwg.mxu0
  %549 = vmatprep.subr.mxu0 0.0
  %550 = vmatpush1.msra.mxu0 0.0
  %551 = vmatprep.subr.mxu0 0.0
  %552 = vmatpush1.msra.mxu0 0.0
  %553 = vmatprep.subr.mxu0 0.0
  %554 = vmatpush1.msra.mxu0 0.0
  %555 = vmatprep.subr.mxu0 0.0
  %556 = vmatpush1.msra.mxu0 0.0
  %557 = vmatprep.subr.mxu0 0.0
  %558 = vmatpush1.msra.mxu0 0.0
  %559 = vmatprep.subr.mxu0 0.0
  %560 = vmatpush1.msra.mxu0 0.0
  %561 = vmatprep.subr.mxu0 0.0
  %562 = vmatpush1.msra.mxu0 0.0
  %563 = vmatprep.subr.mxu0 0.0
  %564 = vmatpush1.msra.mxu0 0.0
  %565 = vmatprep.subr.mxu0 0.0
  %566 = vmatpush1.msra.mxu0 0.0
  %567 = vmatprep.subr.mxu0 0.0
  %568 = vmatpush1.msra.mxu0 0.0
  %569 = vmatprep.subr.mxu0 0.0
  %570 = vmatpush1.msra.mxu0 0.0
  %571 = vmatprep.subr.mxu0 0.0
  %572 = vmatpush1.msra.mxu0 0.0
  %573 = vmatprep.subr.mxu0 0.0
  %v574 = vand.u32 %v89, 4294901760
  %v575 = vsub.f32 %v89, %v574
  %576 = vmatpush1.msra.mxu0 %v575
  %577 = vmatprep.subr.mxu0 0.0
  %v578 = vand.u32 %v88, 4294901760
  %v579 = vsub.f32 %v88, %v578
  %580 = vmatpush1.msra.mxu0 %v579
  %581 = vmatprep.subr.mxu0 0.0
  %v582 = vand.u32 %v87, 4294901760
  %v583 = vsub.f32 %v87, %v582
  %584 = vmatpush1.msra.mxu0 %v583
  %585 = vmatprep.subr.mxu0 0.0
  %v586 = vand.u32 %v86, 4294901760
  %v587 = vsub.f32 %v86, %v586
  %588 = vmatpush1.msra.mxu0 %v587
  %589 = vmatprep.subr.mxu0 0.0
  %590 = vmatpush2.msra.mxu0 0.0
  %591 = vmatprep.subr.mxu0 0.0
  %592 = vmatpush2.msra.mxu0 0.0
  %593 = vmatprep.subr.mxu0 0.0
  %594 = vmatpush2.msra.mxu0 0.0
  %595 = vmatprep.subr.mxu0 0.0
  %596 = vmatpush2.msra.mxu0 0.0
  %597 = vmatprep.subr.mxu0 0.0
  %598 = vmatpush2.msra.mxu0 0.0
  %599 = vmatprep.subr.mxu0 0.0
  %600 = vmatpush2.msra.mxu0 0.0
  %601 = vmatprep.subr.mxu0 0.0
  %602 = vmatpush2.msra.mxu0 0.0
  %603 = vmatprep.subr.mxu0 0.0
  %604 = vmatpush2.msra.mxu0 0.0
  %605 = vmatprep.subr.mxu0 0.0
  %606 = vmatpush2.msra.mxu0 0.0
  %607 = vmatprep.subr.mxu0 0.0
  %608 = vmatpush2.msra.mxu0 0.0
  %609 = vmatprep.subr.mxu0 0.0
  %610 = vmatpush2.msra.mxu0 0.0
  %611 = vmatprep.subr.mxu0 0.0
  %612 = vmatpush2.msra.mxu0 0.0
  %613 = vmatprep.subr.mxu0 0.0
  %614 = vmatpush2.msra.mxu0 0.0
  %615 = vmatprep.subr.mxu0 0.0
  %616 = vmatpush2.msra.mxu0 0.0
  %617 = vmatprep.subr.mxu0 0.0
  %618 = vmatpush2.msra.mxu0 0.0
  %619 = vmatprep.subr.mxu0 0.0
  %620 = vmatpush2.msra.mxu0 0.0
  %621 = vmatprep.mubr.f32.mxu0 0.0
  %v622 = vand.u32 %v92, 4294901760
  %v623 = vsub.f32 %v92, %v622
  %624 = vmatmul.mubr.f32.gmra.mxu0 %v623
  %v625 = vpop.f32.mrf.mxu0
  %v626 = vadd.f32 %v456, %v625
  %v627 = vpop.f32.mrf.mxu0
  %628 = vmatprep.mubr.f32.mxu0 0.0
  %v629 = vand.u32 %v95, 4294901760
  %v630 = vsub.f32 %v95, %v629
  %631 = vmatmul.mubr.f32.gmra.mxu0 %v630
  %v632 = vpop.f32.mrf.mxu0
  %v633 = vadd.f32 %v462, %v632
  %v634 = vpop.f32.mrf.mxu0
  %635 = vmatprep.mubr.f32.mxu0 0.0
  %v636 = vand.u32 %v98, 4294901760
  %v637 = vsub.f32 %v98, %v636
  %638 = vmatmul.mubr.f32.gmra.mxu0 %v637
  %v639 = vpop.f32.mrf.mxu0
  %v640 = vadd.f32 %v468, %v639
  %v641 = vpop.f32.mrf.mxu0
  %642 = vmatprep.mubr.f32.mxu0 0.0
  %v643 = vand.u32 %v101, 4294901760
  %v644 = vsub.f32 %v101, %v643
  %645 = vmatmul.mubr.f32.gmra.mxu0 %v644
  %v646 = vpop.f32.mrf.mxu0
  %v647 = vadd.f32 %v474, %v646
  %v648 = vpop.f32.mrf.mxu0
  %649 = vmatprep.mubr.f32.mxu0 0.0
  %v650 = vand.u32 %v104, 4294901760
  %v651 = vsub.f32 %v104, %v650
  %652 = vmatmul.mubr.f32.gmra.mxu0 %v651
  %v653 = vpop.f32.mrf.mxu0
  %v654 = vadd.f32 %v480, %v653
  %v655 = vpop.f32.mrf.mxu0
  %656 = vmatprep.mubr.f32.mxu0 0.0
  %v657 = vand.u32 %v107, 4294901760
  %v658 = vsub.f32 %v107, %v657
  %659 = vmatmul.mubr.f32.gmra.mxu0 %v658
  %v660 = vpop.f32.mrf.mxu0
  %v661 = vadd.f32 %v486, %v660
  %v662 = vpop.f32.mrf.mxu0
  %663 = vmatprep.mubr.f32.mxu0 0.0
  %v664 = vand.u32 %v110, 4294901760
  %v665 = vsub.f32 %v110, %v664
  %666 = vmatmul.mubr.f32.gmra.mxu0 %v665
  %v667 = vpop.f32.mrf.mxu0
  %v668 = vadd.f32 %v492, %v667
  %v669 = vpop.f32.mrf.mxu0
  %670 = vmatprep.mubr.f32.mxu0 0.0
  %v671 = vand.u32 %v113, 4294901760
  %v672 = vsub.f32 %v113, %v671
  %673 = vmatmul.mubr.f32.gmra.mxu0 %v672
  %v674 = vpop.f32.mrf.mxu0
  %v675 = vadd.f32 %v498, %v674
  %v676 = vpop.f32.mrf.mxu0
  %677 = vmatprep.mubr.f32.mxu0 0.0
  %v678 = vand.u32 %v116, 4294901760
  %v679 = vsub.f32 %v116, %v678
  %680 = vmatmul.mubr.f32.gmra.mxu0 %v679
  %v681 = vpop.f32.mrf.mxu0
  %v682 = vadd.f32 %v504, %v681
  %v683 = vpop.f32.mrf.mxu0
  %684 = vmatprep.mubr.f32.mxu0 0.0
  %v685 = vand.u32 %v119, 4294901760
  %v686 = vsub.f32 %v119, %v685
  %687 = vmatmul.mubr.f32.gmra.mxu0 %v686
  %v688 = vpop.f32.mrf.mxu0
  %v689 = vadd.f32 %v510, %v688
  %v690 = vpop.f32.mrf.mxu0
  %691 = vmatprep.mubr.f32.mxu0 0.0
  %v692 = vand.u32 %v122, 4294901760
  %v693 = vsub.f32 %v122, %v692
  %694 = vmatmul.mubr.f32.gmra.mxu0 %v693
  %v695 = vpop.f32.mrf.mxu0
  %v696 = vadd.f32 %v516, %v695
  %v697 = vpop.f32.mrf.mxu0
  %698 = vmatprep.mubr.f32.mxu0 0.0
  %v699 = vand.u32 %v125, 4294901760
  %v700 = vsub.f32 %v125, %v699
  %701 = vmatmul.mubr.f32.gmra.mxu0 %v700
  %v702 = vpop.f32.mrf.mxu0
  %v703 = vadd.f32 %v522, %v702
  %v704 = vpop.f32.mrf.mxu0
  %705 = vmatprep.mubr.f32.mxu0 0.0
  %v706 = vand.u32 %v128, 4294901760
  %v707 = vsub.f32 %v128, %v706
  %708 = vmatmul.mubr.f32.gmra.mxu0 %v707
  %v709 = vpop.f32.mrf.mxu0
  %v710 = vadd.f32 %v528, %v709
  %v711 = vpop.f32.mrf.mxu0
  %712 = vmatprep.mubr.f32.mxu0 0.0
  %v713 = vand.u32 %v131, 4294901760
  %v714 = vsub.f32 %v131, %v713
  %715 = vmatmul.mubr.f32.gmra.mxu0 %v714
  %v716 = vpop.f32.mrf.mxu0
  %v717 = vadd.f32 %v534, %v716
  %v718 = vpop.f32.mrf.mxu0
  %719 = vmatprep.mubr.f32.mxu0 0.0
  %v720 = vand.u32 %v134, 4294901760
  %v721 = vsub.f32 %v134, %v720
  %722 = vmatmul.mubr.f32.gmra.mxu0 %v721
  %v723 = vpop.f32.mrf.mxu0
  %v724 = vadd.f32 %v540, %v723
  %v725 = vpop.f32.mrf.mxu0
  %726 = vmatprep.mubr.f32.mxu0 0.0
  %v727 = vand.u32 %v137, 4294901760
  %v728 = vsub.f32 %v137, %v727
  %729 = vmatmul.mubr.f32.gmra.mxu0 %v728
  %v730 = vpop.f32.mrf.mxu0
  %v731 = vadd.f32 %v546, %v730
  %v732 = vpop.f32.mrf.mxu0
  %733 = vdwg.mxu0
  %734 = vmatprep.subr.mxu0 0.0
  %735 = vmatpush1.msra.mxu0 0.0
  %736 = vmatprep.subr.mxu0 0.0
  %737 = vmatpush1.msra.mxu0 0.0
  %738 = vmatprep.subr.mxu0 0.0
  %739 = vmatpush1.msra.mxu0 0.0
  %740 = vmatprep.subr.mxu0 0.0
  %741 = vmatpush1.msra.mxu0 0.0
  %742 = vmatprep.subr.mxu0 0.0
  %743 = vmatpush1.msra.mxu0 0.0
  %744 = vmatprep.subr.mxu0 0.0
  %745 = vmatpush1.msra.mxu0 0.0
  %746 = vmatprep.subr.mxu0 0.0
  %747 = vmatpush1.msra.mxu0 0.0
  %748 = vmatprep.subr.mxu0 0.0
  %749 = vmatpush1.msra.mxu0 0.0
  %750 = vmatprep.subr.mxu0 0.0
  %751 = vmatpush1.msra.mxu0 0.0
  %752 = vmatprep.subr.mxu0 0.0
  %753 = vmatpush1.msra.mxu0 0.0
  %754 = vmatprep.subr.mxu0 0.0
  %755 = vmatpush1.msra.mxu0 0.0
  %756 = vmatprep.subr.mxu0 0.0
  %757 = vmatpush1.msra.mxu0 0.0
  %758 = vmatprep.subr.mxu0 0.0
  %v759 = vand.u32 %v89, 4294901760
  %760 = vmatpush1.msra.mxu0 %v759
  %761 = vmatprep.subr.mxu0 0.0
  %v762 = vand.u32 %v88, 4294901760
  %763 = vmatpush1.msra.mxu0 %v762
  %764 = vmatprep.subr.mxu0 0.0
  %v765 = vand.u32 %v87, 4294901760
  %766 = vmatpush1.msra.mxu0 %v765
  %767 = vmatprep.subr.mxu0 0.0
  %v768 = vand.u32 %v86, 4294901760
  %769 = vmatpush1.msra.mxu0 %v768
  %770 = vmatprep.subr.mxu0 0.0
  %771 = vmatpush2.msra.mxu0 0.0
  %772 = vmatprep.subr.mxu0 0.0
  %773 = vmatpush2.msra.mxu0 0.0
  %774 = vmatprep.subr.mxu0 0.0
  %775 = vmatpush2.msra.mxu0 0.0
  %776 = vmatprep.subr.mxu0 0.0
  %777 = vmatpush2.msra.mxu0 0.0
  %778 = vmatprep.subr.mxu0 0.0
  %779 = vmatpush2.msra.mxu0 0.0
  %780 = vmatprep.subr.mxu0 0.0
  %781 = vmatpush2.msra.mxu0 0.0
  %782 = vmatprep.subr.mxu0 0.0
  %783 = vmatpush2.msra.mxu0 0.0
  %784 = vmatprep.subr.mxu0 0.0
  %785 = vmatpush2.msra.mxu0 0.0
  %786 = vmatprep.subr.mxu0 0.0
  %787 = vmatpush2.msra.mxu0 0.0
  %788 = vmatprep.subr.mxu0 0.0
  %789 = vmatpush2.msra.mxu0 0.0
  %790 = vmatprep.subr.mxu0 0.0
  %791 = vmatpush2.msra.mxu0 0.0
  %792 = vmatprep.subr.mxu0 0.0
  %793 = vmatpush2.msra.mxu0 0.0
  %794 = vmatprep.subr.mxu0 0.0
  %795 = vmatpush2.msra.mxu0 0.0
  %796 = vmatprep.subr.mxu0 0.0
  %797 = vmatpush2.msra.mxu0 0.0
  %798 = vmatprep.subr.mxu0 0.0
  %799 = vmatpush2.msra.mxu0 0.0
  %800 = vmatprep.subr.mxu0 0.0
  %801 = vmatpush2.msra.mxu0 0.0
  %802 = vmatprep.mubr.f32.mxu0 0.0
  %v803 = vand.u32 %v92, 4294901760
  %v804 = vsub.f32 %v92, %v803
  %v805 = vand.u32 %v804, 4294901760
  %806 = vmatmul.mubr.f32.gmra.mxu0 %v805
  %v807 = vpop.f32.mrf.mxu0
  %v808 = vadd.f32 %v626, %v807
  %v809 = vpop.f32.mrf.mxu0
  %810 = vmatprep.mubr.f32.mxu0 0.0
  %v811 = vand.u32 %v95, 4294901760
  %v812 = vsub.f32 %v95, %v811
  %v813 = vand.u32 %v812, 4294901760
  %814 = vmatmul.mubr.f32.gmra.mxu0 %v813
  %v815 = vpop.f32.mrf.mxu0
  %v816 = vadd.f32 %v633, %v815
  %v817 = vpop.f32.mrf.mxu0
  %818 = vmatprep.mubr.f32.mxu0 0.0
  %v819 = vand.u32 %v98, 4294901760
  %v820 = vsub.f32 %v98, %v819
  %v821 = vand.u32 %v820, 4294901760
  %822 = vmatmul.mubr.f32.gmra.mxu0 %v821
  %v823 = vpop.f32.mrf.mxu0
  %v824 = vadd.f32 %v640, %v823
  %v825 = vpop.f32.mrf.mxu0
  %826 = vmatprep.mubr.f32.mxu0 0.0
  %v827 = vand.u32 %v101, 4294901760
  %v828 = vsub.f32 %v101, %v827
  %v829 = vand.u32 %v828, 4294901760
  %830 = vmatmul.mubr.f32.gmra.mxu0 %v829
  %v831 = vpop.f32.mrf.mxu0
  %v832 = vadd.f32 %v647, %v831
  %v833 = vpop.f32.mrf.mxu0
  %834 = vmatprep.mubr.f32.mxu0 0.0
  %v835 = vand.u32 %v104, 4294901760
  %v836 = vsub.f32 %v104, %v835
  %v837 = vand.u32 %v836, 4294901760
  %838 = vmatmul.mubr.f32.gmra.mxu0 %v837
  %v839 = vpop.f32.mrf.mxu0
  %v840 = vadd.f32 %v654, %v839
  %v841 = vpop.f32.mrf.mxu0
  %842 = vmatprep.mubr.f32.mxu0 0.0
  %v843 = vand.u32 %v107, 4294901760
  %v844 = vsub.f32 %v107, %v843
  %v845 = vand.u32 %v844, 4294901760
  %846 = vmatmul.mubr.f32.gmra.mxu0 %v845
  %v847 = vpop.f32.mrf.mxu0
  %v848 = vadd.f32 %v661, %v847
  %v849 = vpop.f32.mrf.mxu0
  %850 = vmatprep.mubr.f32.mxu0 0.0
  %v851 = vand.u32 %v110, 4294901760
  %v852 = vsub.f32 %v110, %v851
  %v853 = vand.u32 %v852, 4294901760
  %854 = vmatmul.mubr.f32.gmra.mxu0 %v853
  %v855 = vpop.f32.mrf.mxu0
  %v856 = vadd.f32 %v668, %v855
  %v857 = vpop.f32.mrf.mxu0
  %858 = vmatprep.mubr.f32.mxu0 0.0
  %v859 = vand.u32 %v113, 4294901760
  %v860 = vsub.f32 %v113, %v859
  %v861 = vand.u32 %v860, 4294901760
  %862 = vmatmul.mubr.f32.gmra.mxu0 %v861
  %v863 = vpop.f32.mrf.mxu0
  %v864 = vadd.f32 %v675, %v863
  %v865 = vpop.f32.mrf.mxu0
  %866 = vmatprep.mubr.f32.mxu0 0.0
  %v867 = vand.u32 %v116, 4294901760
  %v868 = vsub.f32 %v116, %v867
  %v869 = vand.u32 %v868, 4294901760
  %870 = vmatmul.mubr.f32.gmra.mxu0 %v869
  %v871 = vpop.f32.mrf.mxu0
  %v872 = vadd.f32 %v682, %v871
  %v873 = vpop.f32.mrf.mxu0
  %874 = vmatprep.mubr.f32.mxu0 0.0
  %v875 = vand.u32 %v119, 4294901760
  %v876 = vsub.f32 %v119, %v875
  %v877 = vand.u32 %v876, 4294901760
  %878 = vmatmul.mubr.f32.gmra.mxu0 %v877
  %v879 = vpop.f32.mrf.mxu0
  %v880 = vadd.f32 %v689, %v879
  %v881 = vpop.f32.mrf.mxu0
  %882 = vmatprep.mubr.f32.mxu0 0.0
  %v883 = vand.u32 %v122, 4294901760
  %v884 = vsub.f32 %v122, %v883
  %v885 = vand.u32 %v884, 4294901760
  %886 = vmatmul.mubr.f32.gmra.mxu0 %v885
  %v887 = vpop.f32.mrf.mxu0
  %v888 = vadd.f32 %v696, %v887
  %v889 = vpop.f32.mrf.mxu0
  %890 = vmatprep.mubr.f32.mxu0 0.0
  %v891 = vand.u32 %v125, 4294901760
  %v892 = vsub.f32 %v125, %v891
  %v893 = vand.u32 %v892, 4294901760
  %894 = vmatmul.mubr.f32.gmra.mxu0 %v893
  %v895 = vpop.f32.mrf.mxu0
  %v896 = vadd.f32 %v703, %v895
  %v897 = vpop.f32.mrf.mxu0
  %898 = vmatprep.mubr.f32.mxu0 0.0
  %v899 = vand.u32 %v128, 4294901760
  %v900 = vsub.f32 %v128, %v899
  %v901 = vand.u32 %v900, 4294901760
  %902 = vmatmul.mubr.f32.gmra.mxu0 %v901
  %v903 = vpop.f32.mrf.mxu0
  %v904 = vadd.f32 %v710, %v903
  %v905 = vpop.f32.mrf.mxu0
  %906 = vmatprep.mubr.f32.mxu0 0.0
  %v907 = vand.u32 %v131, 4294901760
  %v908 = vsub.f32 %v131, %v907
  %v909 = vand.u32 %v908, 4294901760
  %910 = vmatmul.mubr.f32.gmra.mxu0 %v909
  %v911 = vpop.f32.mrf.mxu0
  %v912 = vadd.f32 %v717, %v911
  %v913 = vpop.f32.mrf.mxu0
  %914 = vmatprep.mubr.f32.mxu0 0.0
  %v915 = vand.u32 %v134, 4294901760
  %v916 = vsub.f32 %v134, %v915
  %v917 = vand.u32 %v916, 4294901760
  %918 = vmatmul.mubr.f32.gmra.mxu0 %v917
  %v919 = vpop.f32.mrf.mxu0
  %v920 = vadd.f32 %v724, %v919
  %v921 = vpop.f32.mrf.mxu0
  %922 = vmatprep.mubr.f32.mxu0 0.0
  %v923 = vand.u32 %v137, 4294901760
  %v924 = vsub.f32 %v137, %v923
  %v925 = vand.u32 %v924, 4294901760
  %926 = vmatmul.mubr.f32.gmra.mxu0 %v925
  %v927 = vpop.f32.mrf.mxu0
  %v928 = vadd.f32 %v731, %v927
  %v929 = vpop.f32.mrf.mxu0
  %930 = vdwg.mxu0
  %931 = vmatprep.subr.mxu0 0.0
  %932 = vmatpush1.msra.mxu0 0.0
  %933 = vmatprep.subr.mxu0 0.0
  %934 = vmatpush1.msra.mxu0 0.0
  %935 = vmatprep.subr.mxu0 0.0
  %936 = vmatpush1.msra.mxu0 0.0
  %937 = vmatprep.subr.mxu0 0.0
  %938 = vmatpush1.msra.mxu0 0.0
  %939 = vmatprep.subr.mxu0 0.0
  %940 = vmatpush1.msra.mxu0 0.0
  %941 = vmatprep.subr.mxu0 0.0
  %942 = vmatpush1.msra.mxu0 0.0
  %943 = vmatprep.subr.mxu0 0.0
  %944 = vmatpush1.msra.mxu0 0.0
  %945 = vmatprep.subr.mxu0 0.0
  %946 = vmatpush1.msra.mxu0 0.0
  %947 = vmatprep.subr.mxu0 0.0
  %948 = vmatpush1.msra.mxu0 0.0
  %949 = vmatprep.subr.mxu0 0.0
  %950 = vmatpush1.msra.mxu0 0.0
  %951 = vmatprep.subr.mxu0 0.0
  %952 = vmatpush1.msra.mxu0 0.0
  %953 = vmatprep.subr.mxu0 0.0
  %954 = vmatpush1.msra.mxu0 0.0
  %955 = vmatprep.subr.mxu0 0.0
  %v956 = vand.u32 %v89, 4294901760
  %v957 = vsub.f32 %v89, %v956
  %v958 = vand.u32 %v957, 4294901760
  %959 = vmatpush1.msra.mxu0 %v958
  %960 = vmatprep.subr.mxu0 0.0
  %v961 = vand.u32 %v88, 4294901760
  %v962 = vsub.f32 %v88, %v961
  %v963 = vand.u32 %v962, 4294901760
  %964 = vmatpush1.msra.mxu0 %v963
  %965 = vmatprep.subr.mxu0 0.0
  %v966 = vand.u32 %v87, 4294901760
  %v967 = vsub.f32 %v87, %v966
  %v968 = vand.u32 %v967, 4294901760
  %969 = vmatpush1.msra.mxu0 %v968
  %970 = vmatprep.subr.mxu0 0.0
  %v971 = vand.u32 %v86, 4294901760
  %v972 = vsub.f32 %v86, %v971
  %v973 = vand.u32 %v972, 4294901760
  %974 = vmatpush1.msra.mxu0 %v973
  %975 = vmatprep.subr.mxu0 0.0
  %976 = vmatpush2.msra.mxu0 0.0
  %977 = vmatprep.subr.mxu0 0.0
  %978 = vmatpush2.msra.mxu0 0.0
  %979 = vmatprep.subr.mxu0 0.0
  %980 = vmatpush2.msra.mxu0 0.0
  %981 = vmatprep.subr.mxu0 0.0
  %982 = vmatpush2.msra.mxu0 0.0
  %983 = vmatprep.subr.mxu0 0.0
  %984 = vmatpush2.msra.mxu0 0.0
  %985 = vmatprep.subr.mxu0 0.0
  %986 = vmatpush2.msra.mxu0 0.0
  %987 = vmatprep.subr.mxu0 0.0
  %988 = vmatpush2.msra.mxu0 0.0
  %989 = vmatprep.subr.mxu0 0.0
  %990 = vmatpush2.msra.mxu0 0.0
  %991 = vmatprep.subr.mxu0 0.0
  %992 = vmatpush2.msra.mxu0 0.0
  %993 = vmatprep.subr.mxu0 0.0
  %994 = vmatpush2.msra.mxu0 0.0
  %995 = vmatprep.subr.mxu0 0.0
  %996 = vmatpush2.msra.mxu0 0.0
  %997 = vmatprep.subr.mxu0 0.0
  %998 = vmatpush2.msra.mxu0 0.0
  %999 = vmatprep.subr.mxu0 0.0
  %1000 = vmatpush2.msra.mxu0 0.0
  %1001 = vmatprep.subr.mxu0 0.0
  %1002 = vmatpush2.msra.mxu0 0.0
  %1003 = vmatprep.subr.mxu0 0.0
  %1004 = vmatpush2.msra.mxu0 0.0
  %1005 = vmatprep.subr.mxu0 0.0
  %1006 = vmatpush2.msra.mxu0 0.0
  %1007 = vmatprep.mubr.f32.mxu0 0.0
  %v1008 = vand.u32 %v92, 4294901760
  %1009 = vmatmul.mubr.f32.gmra.mxu0 %v1008
  %v1010 = vpop.f32.mrf.mxu0
  %v1011 = vadd.f32 %v808, %v1010
  %v1012 = vpop.f32.mrf.mxu0
  %1013 = vmatprep.mubr.f32.mxu0 0.0
  %v1014 = vand.u32 %v95, 4294901760
  %1015 = vmatmul.mubr.f32.gmra.mxu0 %v1014
  %v1016 = vpop.f32.mrf.mxu0
  %v1017 = vadd.f32 %v816, %v1016
  %v1018 = vpop.f32.mrf.mxu0
  %1019 = vmatprep.mubr.f32.mxu0 0.0
  %v1020 = vand.u32 %v98, 4294901760
  %1021 = vmatmul.mubr.f32.gmra.mxu0 %v1020
  %v1022 = vpop.f32.mrf.mxu0
  %v1023 = vadd.f32 %v824, %v1022
  %v1024 = vpop.f32.mrf.mxu0
  %1025 = vmatprep.mubr.f32.mxu0 0.0
  %v1026 = vand.u32 %v101, 4294901760
  %1027 = vmatmul.mubr.f32.gmra.mxu0 %v1026
  %v1028 = vpop.f32.mrf.mxu0
  %v1029 = vadd.f32 %v832, %v1028
  %v1030 = vpop.f32.mrf.mxu0
  %1031 = vmatprep.mubr.f32.mxu0 0.0
  %v1032 = vand.u32 %v104, 4294901760
  %1033 = vmatmul.mubr.f32.gmra.mxu0 %v1032
  %v1034 = vpop.f32.mrf.mxu0
  %v1035 = vadd.f32 %v840, %v1034
  %v1036 = vpop.f32.mrf.mxu0
  %1037 = vmatprep.mubr.f32.mxu0 0.0
  %v1038 = vand.u32 %v107, 4294901760
  %1039 = vmatmul.mubr.f32.gmra.mxu0 %v1038
  %v1040 = vpop.f32.mrf.mxu0
  %v1041 = vadd.f32 %v848, %v1040
  %v1042 = vpop.f32.mrf.mxu0
  %1043 = vmatprep.mubr.f32.mxu0 0.0
  %v1044 = vand.u32 %v110, 4294901760
  %1045 = vmatmul.mubr.f32.gmra.mxu0 %v1044
  %v1046 = vpop.f32.mrf.mxu0
  %v1047 = vadd.f32 %v856, %v1046
  %v1048 = vpop.f32.mrf.mxu0
  %1049 = vmatprep.mubr.f32.mxu0 0.0
  %v1050 = vand.u32 %v113, 4294901760
  %1051 = vmatmul.mubr.f32.gmra.mxu0 %v1050
  %v1052 = vpop.f32.mrf.mxu0
  %v1053 = vadd.f32 %v864, %v1052
  %v1054 = vpop.f32.mrf.mxu0
  %1055 = vmatprep.mubr.f32.mxu0 0.0
  %v1056 = vand.u32 %v116, 4294901760
  %1057 = vmatmul.mubr.f32.gmra.mxu0 %v1056
  %v1058 = vpop.f32.mrf.mxu0
  %v1059 = vadd.f32 %v872, %v1058
  %v1060 = vpop.f32.mrf.mxu0
  %1061 = vmatprep.mubr.f32.mxu0 0.0
  %v1062 = vand.u32 %v119, 4294901760
  %1063 = vmatmul.mubr.f32.gmra.mxu0 %v1062
  %v1064 = vpop.f32.mrf.mxu0
  %v1065 = vadd.f32 %v880, %v1064
  %v1066 = vpop.f32.mrf.mxu0
  %1067 = vmatprep.mubr.f32.mxu0 0.0
  %v1068 = vand.u32 %v122, 4294901760
  %1069 = vmatmul.mubr.f32.gmra.mxu0 %v1068
  %v1070 = vpop.f32.mrf.mxu0
  %v1071 = vadd.f32 %v888, %v1070
  %v1072 = vpop.f32.mrf.mxu0
  %1073 = vmatprep.mubr.f32.mxu0 0.0
  %v1074 = vand.u32 %v125, 4294901760
  %1075 = vmatmul.mubr.f32.gmra.mxu0 %v1074
  %v1076 = vpop.f32.mrf.mxu0
  %v1077 = vadd.f32 %v896, %v1076
  %v1078 = vpop.f32.mrf.mxu0
  %1079 = vmatprep.mubr.f32.mxu0 0.0
  %v1080 = vand.u32 %v128, 4294901760
  %1081 = vmatmul.mubr.f32.gmra.mxu0 %v1080
  %v1082 = vpop.f32.mrf.mxu0
  %v1083 = vadd.f32 %v904, %v1082
  %v1084 = vpop.f32.mrf.mxu0
  %1085 = vmatprep.mubr.f32.mxu0 0.0
  %v1086 = vand.u32 %v131, 4294901760
  %1087 = vmatmul.mubr.f32.gmra.mxu0 %v1086
  %v1088 = vpop.f32.mrf.mxu0
  %v1089 = vadd.f32 %v912, %v1088
  %v1090 = vpop.f32.mrf.mxu0
  %1091 = vmatprep.mubr.f32.mxu0 0.0
  %v1092 = vand.u32 %v134, 4294901760
  %1093 = vmatmul.mubr.f32.gmra.mxu0 %v1092
  %v1094 = vpop.f32.mrf.mxu0
  %v1095 = vadd.f32 %v920, %v1094
  %v1096 = vpop.f32.mrf.mxu0
  %1097 = vmatprep.mubr.f32.mxu0 0.0
  %v1098 = vand.u32 %v137, 4294901760
  %1099 = vmatmul.mubr.f32.gmra.mxu0 %v1098
  %v1100 = vpop.f32.mrf.mxu0
  %v1101 = vadd.f32 %v928, %v1100
  %v1102 = vpop.f32.mrf.mxu0
  %1103 = vdwg.mxu0
  %1104 = vmatprep.subr.mxu0 0.0
  %1105 = vmatpush1.msra.mxu0 0.0
  %1106 = vmatprep.subr.mxu0 0.0
  %1107 = vmatpush1.msra.mxu0 0.0
  %1108 = vmatprep.subr.mxu0 0.0
  %1109 = vmatpush1.msra.mxu0 0.0
  %1110 = vmatprep.subr.mxu0 0.0
  %1111 = vmatpush1.msra.mxu0 0.0
  %1112 = vmatprep.subr.mxu0 0.0
  %1113 = vmatpush1.msra.mxu0 0.0
  %1114 = vmatprep.subr.mxu0 0.0
  %1115 = vmatpush1.msra.mxu0 0.0
  %1116 = vmatprep.subr.mxu0 0.0
  %1117 = vmatpush1.msra.mxu0 0.0
  %1118 = vmatprep.subr.mxu0 0.0
  %1119 = vmatpush1.msra.mxu0 0.0
  %1120 = vmatprep.subr.mxu0 0.0
  %1121 = vmatpush1.msra.mxu0 0.0
  %1122 = vmatprep.subr.mxu0 0.0
  %1123 = vmatpush1.msra.mxu0 0.0
  %1124 = vmatprep.subr.mxu0 0.0
  %1125 = vmatpush1.msra.mxu0 0.0
  %1126 = vmatprep.subr.mxu0 0.0
  %1127 = vmatpush1.msra.mxu0 0.0
  %1128 = vmatprep.subr.mxu0 0.0
  %v1129 = vand.u32 %v89, 4294901760
  %1130 = vmatpush1.msra.mxu0 %v1129
  %1131 = vmatprep.subr.mxu0 0.0
  %v1132 = vand.u32 %v88, 4294901760
  %1133 = vmatpush1.msra.mxu0 %v1132
  %1134 = vmatprep.subr.mxu0 0.0
  %v1135 = vand.u32 %v87, 4294901760
  %1136 = vmatpush1.msra.mxu0 %v1135
  %1137 = vmatprep.subr.mxu0 0.0
  %v1138 = vand.u32 %v86, 4294901760
  %1139 = vmatpush1.msra.mxu0 %v1138
  %1140 = vmatprep.subr.mxu0 0.0
  %1141 = vmatpush2.msra.mxu0 0.0
  %1142 = vmatprep.subr.mxu0 0.0
  %1143 = vmatpush2.msra.mxu0 0.0
  %1144 = vmatprep.subr.mxu0 0.0
  %1145 = vmatpush2.msra.mxu0 0.0
  %1146 = vmatprep.subr.mxu0 0.0
  %1147 = vmatpush2.msra.mxu0 0.0
  %1148 = vmatprep.subr.mxu0 0.0
  %1149 = vmatpush2.msra.mxu0 0.0
  %1150 = vmatprep.subr.mxu0 0.0
  %1151 = vmatpush2.msra.mxu0 0.0
  %1152 = vmatprep.subr.mxu0 0.0
  %1153 = vmatpush2.msra.mxu0 0.0
  %1154 = vmatprep.subr.mxu0 0.0
  %1155 = vmatpush2.msra.mxu0 0.0
  %1156 = vmatprep.subr.mxu0 0.0
  %1157 = vmatpush2.msra.mxu0 0.0
  %1158 = vmatprep.subr.mxu0 0.0
  %1159 = vmatpush2.msra.mxu0 0.0
  %1160 = vmatprep.subr.mxu0 0.0
  %1161 = vmatpush2.msra.mxu0 0.0
  %1162 = vmatprep.subr.mxu0 0.0
  %1163 = vmatpush2.msra.mxu0 0.0
  %1164 = vmatprep.subr.mxu0 0.0
  %1165 = vmatpush2.msra.mxu0 0.0
  %1166 = vmatprep.subr.mxu0 0.0
  %1167 = vmatpush2.msra.mxu0 0.0
  %1168 = vmatprep.subr.mxu0 0.0
  %1169 = vmatpush2.msra.mxu0 0.0
  %1170 = vmatprep.subr.mxu0 0.0
  %1171 = vmatpush2.msra.mxu0 0.0
  %1172 = vmatprep.mubr.f32.mxu0 0.0
  %v1173 = vand.u32 %v92, 4294901760
  %1174 = vmatmul.mubr.f32.gmra.mxu0 %v1173
  %v1175 = vpop.f32.mrf.mxu0
  %v1176 = vadd.f32 %v1011, %v1175
  %v1177 = vpop.f32.mrf.mxu0
  %1178 = vmatprep.mubr.f32.mxu0 0.0
  %v1179 = vand.u32 %v95, 4294901760
  %1180 = vmatmul.mubr.f32.gmra.mxu0 %v1179
  %v1181 = vpop.f32.mrf.mxu0
  %v1182 = vadd.f32 %v1017, %v1181
  %v1183 = vpop.f32.mrf.mxu0
  %1184 = vmatprep.mubr.f32.mxu0 0.0
  %v1185 = vand.u32 %v98, 4294901760
  %1186 = vmatmul.mubr.f32.gmra.mxu0 %v1185
  %v1187 = vpop.f32.mrf.mxu0
  %v1188 = vadd.f32 %v1023, %v1187
  %v1189 = vpop.f32.mrf.mxu0
  %1190 = vmatprep.mubr.f32.mxu0 0.0
  %v1191 = vand.u32 %v101, 4294901760
  %1192 = vmatmul.mubr.f32.gmra.mxu0 %v1191
  %v1193 = vpop.f32.mrf.mxu0
  %v1194 = vadd.f32 %v1029, %v1193
  %v1195 = vpop.f32.mrf.mxu0
  %1196 = vmatprep.mubr.f32.mxu0 0.0
  %v1197 = vand.u32 %v104, 4294901760
  %1198 = vmatmul.mubr.f32.gmra.mxu0 %v1197
  %v1199 = vpop.f32.mrf.mxu0
  %v1200 = vadd.f32 %v1035, %v1199
  %v1201 = vpop.f32.mrf.mxu0
  %1202 = vmatprep.mubr.f32.mxu0 0.0
  %v1203 = vand.u32 %v107, 4294901760
  %1204 = vmatmul.mubr.f32.gmra.mxu0 %v1203
  %v1205 = vpop.f32.mrf.mxu0
  %v1206 = vadd.f32 %v1041, %v1205
  %v1207 = vpop.f32.mrf.mxu0
  %1208 = vmatprep.mubr.f32.mxu0 0.0
  %v1209 = vand.u32 %v110, 4294901760
  %1210 = vmatmul.mubr.f32.gmra.mxu0 %v1209
  %v1211 = vpop.f32.mrf.mxu0
  %v1212 = vadd.f32 %v1047, %v1211
  %v1213 = vpop.f32.mrf.mxu0
  %1214 = vmatprep.mubr.f32.mxu0 0.0
  %v1215 = vand.u32 %v113, 4294901760
  %1216 = vmatmul.mubr.f32.gmra.mxu0 %v1215
  %v1217 = vpop.f32.mrf.mxu0
  %v1218 = vadd.f32 %v1053, %v1217
  %v1219 = vpop.f32.mrf.mxu0
  %1220 = vmatprep.mubr.f32.mxu0 0.0
  %v1221 = vand.u32 %v116, 4294901760
  %1222 = vmatmul.mubr.f32.gmra.mxu0 %v1221
  %v1223 = vpop.f32.mrf.mxu0
  %v1224 = vadd.f32 %v1059, %v1223
  %v1225 = vpop.f32.mrf.mxu0
  %1226 = vmatprep.mubr.f32.mxu0 0.0
  %v1227 = vand.u32 %v119, 4294901760
  %1228 = vmatmul.mubr.f32.gmra.mxu0 %v1227
  %v1229 = vpop.f32.mrf.mxu0
  %v1230 = vadd.f32 %v1065, %v1229
  %v1231 = vpop.f32.mrf.mxu0
  %1232 = vmatprep.mubr.f32.mxu0 0.0
  %v1233 = vand.u32 %v122, 4294901760
  %1234 = vmatmul.mubr.f32.gmra.mxu0 %v1233
  %v1235 = vpop.f32.mrf.mxu0
  %v1236 = vadd.f32 %v1071, %v1235
  %v1237 = vpop.f32.mrf.mxu0
  %1238 = vmatprep.mubr.f32.mxu0 0.0
  %v1239 = vand.u32 %v125, 4294901760
  %1240 = vmatmul.mubr.f32.gmra.mxu0 %v1239
  %v1241 = vpop.f32.mrf.mxu0
  %v1242 = vadd.f32 %v1077, %v1241
  %v1243 = vpop.f32.mrf.mxu0
  %1244 = vmatprep.mubr.f32.mxu0 0.0
  %v1245 = vand.u32 %v128, 4294901760
  %1246 = vmatmul.mubr.f32.gmra.mxu0 %v1245
  %v1247 = vpop.f32.mrf.mxu0
  %v1248 = vadd.f32 %v1083, %v1247
  %v1249 = vpop.f32.mrf.mxu0
  %1250 = vmatprep.mubr.f32.mxu0 0.0
  %v1251 = vand.u32 %v131, 4294901760
  %1252 = vmatmul.mubr.f32.gmra.mxu0 %v1251
  %v1253 = vpop.f32.mrf.mxu0
  %v1254 = vadd.f32 %v1089, %v1253
  %v1255 = vpop.f32.mrf.mxu0
  %1256 = vmatprep.mubr.f32.mxu0 0.0
  %v1257 = vand.u32 %v134, 4294901760
  %1258 = vmatmul.mubr.f32.gmra.mxu0 %v1257
  %v1259 = vpop.f32.mrf.mxu0
  %v1260 = vadd.f32 %v1095, %v1259
  %v1261 = vpop.f32.mrf.mxu0
  %1262 = vmatprep.mubr.f32.mxu0 0.0
  %v1263 = vand.u32 %v137, 4294901760
  %1264 = vmatmul.mubr.f32.gmra.mxu0 %v1263
  %v1265 = vpop.f32.mrf.mxu0
  %v1266 = vadd.f32 %v1101, %v1265
  %v1267 = vpop.f32.mrf.mxu0
  %1268 = vdwg.mxu0
  %v1270 = vsel %vm90, %v33, 0
  %v1273 = vsel %vm90, %v34, 0
  %v1276 = vsel %vm90, %v35, 0
  %v1279 = vsel %vm90, %v36, 0
  %v1282 = vsel %vm90, %v37, 0
  %v1285 = vsel %vm90, %v38, 0
  %v1288 = vsel %vm90, %v39, 0
  %v1291 = vsel %vm90, %v40, 0
  %v1294 = vsel %vm90, %v41, 0
  %v1297 = vsel %vm90, %v42, 0
  %v1300 = vsel %vm90, %v43, 0
  %v1303 = vsel %vm90, %v44, 0
  %v1306 = vsel %vm90, %v45, 0
  %v1309 = vsel %vm90, %v46, 0
  %v1312 = vsel %vm90, %v47, 0
  %v1315 = vsel %vm90, %v48, 0
  %1317 = vmatprep.subr.mxu0 0.0
  %1318 = vmatpush1.msra.mxu0 0.0
  %1319 = vmatprep.subr.mxu0 0.0
  %1320 = vmatpush1.msra.mxu0 0.0
  %1321 = vmatprep.subr.mxu0 0.0
  %1322 = vmatpush1.msra.mxu0 0.0
  %1323 = vmatprep.subr.mxu0 0.0
  %1324 = vmatpush1.msra.mxu0 0.0
  %1325 = vmatprep.subr.mxu0 0.0
  %1326 = vmatpush1.msra.mxu0 0.0
  %1327 = vmatprep.subr.mxu0 0.0
  %1328 = vmatpush1.msra.mxu0 0.0
  %1329 = vmatprep.subr.mxu0 0.0
  %1330 = vmatpush1.msra.mxu0 0.0
  %1331 = vmatprep.subr.mxu0 0.0
  %1332 = vmatpush1.msra.mxu0 0.0
  %1333 = vmatprep.subr.mxu0 0.0
  %1334 = vmatpush1.msra.mxu0 0.0
  %1335 = vmatprep.subr.mxu0 0.0
  %1336 = vmatpush1.msra.mxu0 0.0
  %1337 = vmatprep.subr.mxu0 0.0
  %1338 = vmatpush1.msra.mxu0 0.0
  %1339 = vmatprep.subr.mxu0 0.0
  %1340 = vmatpush1.msra.mxu0 0.0
  %1341 = vmatprep.subr.mxu0 0.0
  %v1342 = vand.u32 %v85, 4294901760
  %1343 = vmatpush1.msra.mxu0 %v1342
  %1344 = vmatprep.subr.mxu0 0.0
  %v1345 = vand.u32 %v84, 4294901760
  %1346 = vmatpush1.msra.mxu0 %v1345
  %1347 = vmatprep.subr.mxu0 0.0
  %v1348 = vand.u32 %v83, 4294901760
  %1349 = vmatpush1.msra.mxu0 %v1348
  %1350 = vmatprep.subr.mxu0 0.0
  %v1351 = vand.u32 %v82, 4294901760
  %1352 = vmatpush1.msra.mxu0 %v1351
  %1353 = vmatprep.subr.mxu0 0.0
  %1354 = vmatpush2.msra.mxu0 0.0
  %1355 = vmatprep.subr.mxu0 0.0
  %1356 = vmatpush2.msra.mxu0 0.0
  %1357 = vmatprep.subr.mxu0 0.0
  %1358 = vmatpush2.msra.mxu0 0.0
  %1359 = vmatprep.subr.mxu0 0.0
  %1360 = vmatpush2.msra.mxu0 0.0
  %1361 = vmatprep.subr.mxu0 0.0
  %1362 = vmatpush2.msra.mxu0 0.0
  %1363 = vmatprep.subr.mxu0 0.0
  %1364 = vmatpush2.msra.mxu0 0.0
  %1365 = vmatprep.subr.mxu0 0.0
  %1366 = vmatpush2.msra.mxu0 0.0
  %1367 = vmatprep.subr.mxu0 0.0
  %1368 = vmatpush2.msra.mxu0 0.0
  %1369 = vmatprep.subr.mxu0 0.0
  %1370 = vmatpush2.msra.mxu0 0.0
  %1371 = vmatprep.subr.mxu0 0.0
  %1372 = vmatpush2.msra.mxu0 0.0
  %1373 = vmatprep.subr.mxu0 0.0
  %1374 = vmatpush2.msra.mxu0 0.0
  %1375 = vmatprep.subr.mxu0 0.0
  %1376 = vmatpush2.msra.mxu0 0.0
  %1377 = vmatprep.subr.mxu0 0.0
  %1378 = vmatpush2.msra.mxu0 0.0
  %1379 = vmatprep.subr.mxu0 0.0
  %1380 = vmatpush2.msra.mxu0 0.0
  %1381 = vmatprep.subr.mxu0 0.0
  %1382 = vmatpush2.msra.mxu0 0.0
  %1383 = vmatprep.subr.mxu0 0.0
  %1384 = vmatpush2.msra.mxu0 0.0
  %1385 = vmatprep.mubr.f32.mxu0 0.0
  %v1386 = vand.u32 %v1270, 4294901760
  %v1387 = vsub.f32 %v1270, %v1386
  %v1388 = vand.u32 %v1387, 4294901760
  %v1389 = vsub.f32 %v1387, %v1388
  %v1390 = vand.u32 %v1389, 4294901760
  %1391 = vmatmul.mubr.f32.gmra.mxu0 %v1390
  %v1392 = vpop.f32.mrf.mxu0
  %v1393 = vadd.f32 %v1176, %v1392
  %v1394 = vpop.f32.mrf.mxu0
  %1395 = vmatprep.mubr.f32.mxu0 0.0
  %v1396 = vand.u32 %v1273, 4294901760
  %v1397 = vsub.f32 %v1273, %v1396
  %v1398 = vand.u32 %v1397, 4294901760
  %v1399 = vsub.f32 %v1397, %v1398
  %v1400 = vand.u32 %v1399, 4294901760
  %1401 = vmatmul.mubr.f32.gmra.mxu0 %v1400
  %v1402 = vpop.f32.mrf.mxu0
  %v1403 = vadd.f32 %v1182, %v1402
  %v1404 = vpop.f32.mrf.mxu0
  %1405 = vmatprep.mubr.f32.mxu0 0.0
  %v1406 = vand.u32 %v1276, 4294901760
  %v1407 = vsub.f32 %v1276, %v1406
  %v1408 = vand.u32 %v1407, 4294901760
  %v1409 = vsub.f32 %v1407, %v1408
  %v1410 = vand.u32 %v1409, 4294901760
  %1411 = vmatmul.mubr.f32.gmra.mxu0 %v1410
  %v1412 = vpop.f32.mrf.mxu0
  %v1413 = vadd.f32 %v1188, %v1412
  %v1414 = vpop.f32.mrf.mxu0
  %1415 = vmatprep.mubr.f32.mxu0 0.0
  %v1416 = vand.u32 %v1279, 4294901760
  %v1417 = vsub.f32 %v1279, %v1416
  %v1418 = vand.u32 %v1417, 4294901760
  %v1419 = vsub.f32 %v1417, %v1418
  %v1420 = vand.u32 %v1419, 4294901760
  %1421 = vmatmul.mubr.f32.gmra.mxu0 %v1420
  %v1422 = vpop.f32.mrf.mxu0
  %v1423 = vadd.f32 %v1194, %v1422
  %v1424 = vpop.f32.mrf.mxu0
  %1425 = vmatprep.mubr.f32.mxu0 0.0
  %v1426 = vand.u32 %v1282, 4294901760
  %v1427 = vsub.f32 %v1282, %v1426
  %v1428 = vand.u32 %v1427, 4294901760
  %v1429 = vsub.f32 %v1427, %v1428
  %v1430 = vand.u32 %v1429, 4294901760
  %1431 = vmatmul.mubr.f32.gmra.mxu0 %v1430
  %v1432 = vpop.f32.mrf.mxu0
  %v1433 = vadd.f32 %v1200, %v1432
  %v1434 = vpop.f32.mrf.mxu0
  %1435 = vmatprep.mubr.f32.mxu0 0.0
  %v1436 = vand.u32 %v1285, 4294901760
  %v1437 = vsub.f32 %v1285, %v1436
  %v1438 = vand.u32 %v1437, 4294901760
  %v1439 = vsub.f32 %v1437, %v1438
  %v1440 = vand.u32 %v1439, 4294901760
  %1441 = vmatmul.mubr.f32.gmra.mxu0 %v1440
  %v1442 = vpop.f32.mrf.mxu0
  %v1443 = vadd.f32 %v1206, %v1442
  %v1444 = vpop.f32.mrf.mxu0
  %1445 = vmatprep.mubr.f32.mxu0 0.0
  %v1446 = vand.u32 %v1288, 4294901760
  %v1447 = vsub.f32 %v1288, %v1446
  %v1448 = vand.u32 %v1447, 4294901760
  %v1449 = vsub.f32 %v1447, %v1448
  %v1450 = vand.u32 %v1449, 4294901760
  %1451 = vmatmul.mubr.f32.gmra.mxu0 %v1450
  %v1452 = vpop.f32.mrf.mxu0
  %v1453 = vadd.f32 %v1212, %v1452
  %v1454 = vpop.f32.mrf.mxu0
  %1455 = vmatprep.mubr.f32.mxu0 0.0
  %v1456 = vand.u32 %v1291, 4294901760
  %v1457 = vsub.f32 %v1291, %v1456
  %v1458 = vand.u32 %v1457, 4294901760
  %v1459 = vsub.f32 %v1457, %v1458
  %v1460 = vand.u32 %v1459, 4294901760
  %1461 = vmatmul.mubr.f32.gmra.mxu0 %v1460
  %v1462 = vpop.f32.mrf.mxu0
  %v1463 = vadd.f32 %v1218, %v1462
  %v1464 = vpop.f32.mrf.mxu0
  %1465 = vmatprep.mubr.f32.mxu0 0.0
  %v1466 = vand.u32 %v1294, 4294901760
  %v1467 = vsub.f32 %v1294, %v1466
  %v1468 = vand.u32 %v1467, 4294901760
  %v1469 = vsub.f32 %v1467, %v1468
  %v1470 = vand.u32 %v1469, 4294901760
  %1471 = vmatmul.mubr.f32.gmra.mxu0 %v1470
  %v1472 = vpop.f32.mrf.mxu0
  %v1473 = vadd.f32 %v1224, %v1472
  %v1474 = vpop.f32.mrf.mxu0
  %1475 = vmatprep.mubr.f32.mxu0 0.0
  %v1476 = vand.u32 %v1297, 4294901760
  %v1477 = vsub.f32 %v1297, %v1476
  %v1478 = vand.u32 %v1477, 4294901760
  %v1479 = vsub.f32 %v1477, %v1478
  %v1480 = vand.u32 %v1479, 4294901760
  %1481 = vmatmul.mubr.f32.gmra.mxu0 %v1480
  %v1482 = vpop.f32.mrf.mxu0
  %v1483 = vadd.f32 %v1230, %v1482
  %v1484 = vpop.f32.mrf.mxu0
  %1485 = vmatprep.mubr.f32.mxu0 0.0
  %v1486 = vand.u32 %v1300, 4294901760
  %v1487 = vsub.f32 %v1300, %v1486
  %v1488 = vand.u32 %v1487, 4294901760
  %v1489 = vsub.f32 %v1487, %v1488
  %v1490 = vand.u32 %v1489, 4294901760
  %1491 = vmatmul.mubr.f32.gmra.mxu0 %v1490
  %v1492 = vpop.f32.mrf.mxu0
  %v1493 = vadd.f32 %v1236, %v1492
  %v1494 = vpop.f32.mrf.mxu0
  %1495 = vmatprep.mubr.f32.mxu0 0.0
  %v1496 = vand.u32 %v1303, 4294901760
  %v1497 = vsub.f32 %v1303, %v1496
  %v1498 = vand.u32 %v1497, 4294901760
  %v1499 = vsub.f32 %v1497, %v1498
  %v1500 = vand.u32 %v1499, 4294901760
  %1501 = vmatmul.mubr.f32.gmra.mxu0 %v1500
  %v1502 = vpop.f32.mrf.mxu0
  %v1503 = vadd.f32 %v1242, %v1502
  %v1504 = vpop.f32.mrf.mxu0
  %1505 = vmatprep.mubr.f32.mxu0 0.0
  %v1506 = vand.u32 %v1306, 4294901760
  %v1507 = vsub.f32 %v1306, %v1506
  %v1508 = vand.u32 %v1507, 4294901760
  %v1509 = vsub.f32 %v1507, %v1508
  %v1510 = vand.u32 %v1509, 4294901760
  %1511 = vmatmul.mubr.f32.gmra.mxu0 %v1510
  %v1512 = vpop.f32.mrf.mxu0
  %v1513 = vadd.f32 %v1248, %v1512
  %v1514 = vpop.f32.mrf.mxu0
  %1515 = vmatprep.mubr.f32.mxu0 0.0
  %v1516 = vand.u32 %v1309, 4294901760
  %v1517 = vsub.f32 %v1309, %v1516
  %v1518 = vand.u32 %v1517, 4294901760
  %v1519 = vsub.f32 %v1517, %v1518
  %v1520 = vand.u32 %v1519, 4294901760
  %1521 = vmatmul.mubr.f32.gmra.mxu0 %v1520
  %v1522 = vpop.f32.mrf.mxu0
  %v1523 = vadd.f32 %v1254, %v1522
  %v1524 = vpop.f32.mrf.mxu0
  %1525 = vmatprep.mubr.f32.mxu0 0.0
  %v1526 = vand.u32 %v1312, 4294901760
  %v1527 = vsub.f32 %v1312, %v1526
  %v1528 = vand.u32 %v1527, 4294901760
  %v1529 = vsub.f32 %v1527, %v1528
  %v1530 = vand.u32 %v1529, 4294901760
  %1531 = vmatmul.mubr.f32.gmra.mxu0 %v1530
  %v1532 = vpop.f32.mrf.mxu0
  %v1533 = vadd.f32 %v1260, %v1532
  %v1534 = vpop.f32.mrf.mxu0
  %1535 = vmatprep.mubr.f32.mxu0 0.0
  %v1536 = vand.u32 %v1315, 4294901760
  %v1537 = vsub.f32 %v1315, %v1536
  %v1538 = vand.u32 %v1537, 4294901760
  %v1539 = vsub.f32 %v1537, %v1538
  %v1540 = vand.u32 %v1539, 4294901760
  %1541 = vmatmul.mubr.f32.gmra.mxu0 %v1540
  %v1542 = vpop.f32.mrf.mxu0
  %v1543 = vadd.f32 %v1266, %v1542
  %v1544 = vpop.f32.mrf.mxu0
  %1545 = vdwg.mxu0
  %1546 = vmatprep.subr.mxu0 0.0
  %1547 = vmatpush1.msra.mxu0 0.0
  %1548 = vmatprep.subr.mxu0 0.0
  %1549 = vmatpush1.msra.mxu0 0.0
  %1550 = vmatprep.subr.mxu0 0.0
  %1551 = vmatpush1.msra.mxu0 0.0
  %1552 = vmatprep.subr.mxu0 0.0
  %1553 = vmatpush1.msra.mxu0 0.0
  %1554 = vmatprep.subr.mxu0 0.0
  %1555 = vmatpush1.msra.mxu0 0.0
  %1556 = vmatprep.subr.mxu0 0.0
  %1557 = vmatpush1.msra.mxu0 0.0
  %1558 = vmatprep.subr.mxu0 0.0
  %1559 = vmatpush1.msra.mxu0 0.0
  %1560 = vmatprep.subr.mxu0 0.0
  %1561 = vmatpush1.msra.mxu0 0.0
  %1562 = vmatprep.subr.mxu0 0.0
  %1563 = vmatpush1.msra.mxu0 0.0
  %1564 = vmatprep.subr.mxu0 0.0
  %1565 = vmatpush1.msra.mxu0 0.0
  %1566 = vmatprep.subr.mxu0 0.0
  %1567 = vmatpush1.msra.mxu0 0.0
  %1568 = vmatprep.subr.mxu0 0.0
  %1569 = vmatpush1.msra.mxu0 0.0
  %1570 = vmatprep.subr.mxu0 0.0
  %v1571 = vand.u32 %v85, 4294901760
  %v1572 = vsub.f32 %v85, %v1571
  %v1573 = vand.u32 %v1572, 4294901760
  %v1574 = vsub.f32 %v1572, %v1573
  %v1575 = vand.u32 %v1574, 4294901760
  %1576 = vmatpush1.msra.mxu0 %v1575
  %1577 = vmatprep.subr.mxu0 0.0
  %v1578 = vand.u32 %v84, 4294901760
  %v1579 = vsub.f32 %v84, %v1578
  %v1580 = vand.u32 %v1579, 4294901760
  %v1581 = vsub.f32 %v1579, %v1580
  %v1582 = vand.u32 %v1581, 4294901760
  %1583 = vmatpush1.msra.mxu0 %v1582
  %1584 = vmatprep.subr.mxu0 0.0
  %v1585 = vand.u32 %v83, 4294901760
  %v1586 = vsub.f32 %v83, %v1585
  %v1587 = vand.u32 %v1586, 4294901760
  %v1588 = vsub.f32 %v1586, %v1587
  %v1589 = vand.u32 %v1588, 4294901760
  %1590 = vmatpush1.msra.mxu0 %v1589
  %1591 = vmatprep.subr.mxu0 0.0
  %v1592 = vand.u32 %v82, 4294901760
  %v1593 = vsub.f32 %v82, %v1592
  %v1594 = vand.u32 %v1593, 4294901760
  %v1595 = vsub.f32 %v1593, %v1594
  %v1596 = vand.u32 %v1595, 4294901760
  %1597 = vmatpush1.msra.mxu0 %v1596
  %1598 = vmatprep.subr.mxu0 0.0
  %1599 = vmatpush2.msra.mxu0 0.0
  %1600 = vmatprep.subr.mxu0 0.0
  %1601 = vmatpush2.msra.mxu0 0.0
  %1602 = vmatprep.subr.mxu0 0.0
  %1603 = vmatpush2.msra.mxu0 0.0
  %1604 = vmatprep.subr.mxu0 0.0
  %1605 = vmatpush2.msra.mxu0 0.0
  %1606 = vmatprep.subr.mxu0 0.0
  %1607 = vmatpush2.msra.mxu0 0.0
  %1608 = vmatprep.subr.mxu0 0.0
  %1609 = vmatpush2.msra.mxu0 0.0
  %1610 = vmatprep.subr.mxu0 0.0
  %1611 = vmatpush2.msra.mxu0 0.0
  %1612 = vmatprep.subr.mxu0 0.0
  %1613 = vmatpush2.msra.mxu0 0.0
  %1614 = vmatprep.subr.mxu0 0.0
  %1615 = vmatpush2.msra.mxu0 0.0
  %1616 = vmatprep.subr.mxu0 0.0
  %1617 = vmatpush2.msra.mxu0 0.0
  %1618 = vmatprep.subr.mxu0 0.0
  %1619 = vmatpush2.msra.mxu0 0.0
  %1620 = vmatprep.subr.mxu0 0.0
  %1621 = vmatpush2.msra.mxu0 0.0
  %1622 = vmatprep.subr.mxu0 0.0
  %1623 = vmatpush2.msra.mxu0 0.0
  %1624 = vmatprep.subr.mxu0 0.0
  %1625 = vmatpush2.msra.mxu0 0.0
  %1626 = vmatprep.subr.mxu0 0.0
  %1627 = vmatpush2.msra.mxu0 0.0
  %1628 = vmatprep.subr.mxu0 0.0
  %1629 = vmatpush2.msra.mxu0 0.0
  %1630 = vmatprep.mubr.f32.mxu0 0.0
  %v1631 = vand.u32 %v1270, 4294901760
  %1632 = vmatmul.mubr.f32.gmra.mxu0 %v1631
  %v1633 = vpop.f32.mrf.mxu0
  %v1634 = vadd.f32 %v1393, %v1633
  %v1635 = vpop.f32.mrf.mxu0
  %1636 = vmatprep.mubr.f32.mxu0 0.0
  %v1637 = vand.u32 %v1273, 4294901760
  %1638 = vmatmul.mubr.f32.gmra.mxu0 %v1637
  %v1639 = vpop.f32.mrf.mxu0
  %v1640 = vadd.f32 %v1403, %v1639
  %v1641 = vpop.f32.mrf.mxu0
  %1642 = vmatprep.mubr.f32.mxu0 0.0
  %v1643 = vand.u32 %v1276, 4294901760
  %1644 = vmatmul.mubr.f32.gmra.mxu0 %v1643
  %v1645 = vpop.f32.mrf.mxu0
  %v1646 = vadd.f32 %v1413, %v1645
  %v1647 = vpop.f32.mrf.mxu0
  %1648 = vmatprep.mubr.f32.mxu0 0.0
  %v1649 = vand.u32 %v1279, 4294901760
  %1650 = vmatmul.mubr.f32.gmra.mxu0 %v1649
  %v1651 = vpop.f32.mrf.mxu0
  %v1652 = vadd.f32 %v1423, %v1651
  %v1653 = vpop.f32.mrf.mxu0
  %1654 = vmatprep.mubr.f32.mxu0 0.0
  %v1655 = vand.u32 %v1282, 4294901760
  %1656 = vmatmul.mubr.f32.gmra.mxu0 %v1655
  %v1657 = vpop.f32.mrf.mxu0
  %v1658 = vadd.f32 %v1433, %v1657
  %v1659 = vpop.f32.mrf.mxu0
  %1660 = vmatprep.mubr.f32.mxu0 0.0
  %v1661 = vand.u32 %v1285, 4294901760
  %1662 = vmatmul.mubr.f32.gmra.mxu0 %v1661
  %v1663 = vpop.f32.mrf.mxu0
  %v1664 = vadd.f32 %v1443, %v1663
  %v1665 = vpop.f32.mrf.mxu0
  %1666 = vmatprep.mubr.f32.mxu0 0.0
  %v1667 = vand.u32 %v1288, 4294901760
  %1668 = vmatmul.mubr.f32.gmra.mxu0 %v1667
  %v1669 = vpop.f32.mrf.mxu0
  %v1670 = vadd.f32 %v1453, %v1669
  %v1671 = vpop.f32.mrf.mxu0
  %1672 = vmatprep.mubr.f32.mxu0 0.0
  %v1673 = vand.u32 %v1291, 4294901760
  %1674 = vmatmul.mubr.f32.gmra.mxu0 %v1673
  %v1675 = vpop.f32.mrf.mxu0
  %v1676 = vadd.f32 %v1463, %v1675
  %v1677 = vpop.f32.mrf.mxu0
  %1678 = vmatprep.mubr.f32.mxu0 0.0
  %v1679 = vand.u32 %v1294, 4294901760
  %1680 = vmatmul.mubr.f32.gmra.mxu0 %v1679
  %v1681 = vpop.f32.mrf.mxu0
  %v1682 = vadd.f32 %v1473, %v1681
  %v1683 = vpop.f32.mrf.mxu0
  %1684 = vmatprep.mubr.f32.mxu0 0.0
  %v1685 = vand.u32 %v1297, 4294901760
  %1686 = vmatmul.mubr.f32.gmra.mxu0 %v1685
  %v1687 = vpop.f32.mrf.mxu0
  %v1688 = vadd.f32 %v1483, %v1687
  %v1689 = vpop.f32.mrf.mxu0
  %1690 = vmatprep.mubr.f32.mxu0 0.0
  %v1691 = vand.u32 %v1300, 4294901760
  %1692 = vmatmul.mubr.f32.gmra.mxu0 %v1691
  %v1693 = vpop.f32.mrf.mxu0
  %v1694 = vadd.f32 %v1493, %v1693
  %v1695 = vpop.f32.mrf.mxu0
  %1696 = vmatprep.mubr.f32.mxu0 0.0
  %v1697 = vand.u32 %v1303, 4294901760
  %1698 = vmatmul.mubr.f32.gmra.mxu0 %v1697
  %v1699 = vpop.f32.mrf.mxu0
  %v1700 = vadd.f32 %v1503, %v1699
  %v1701 = vpop.f32.mrf.mxu0
  %1702 = vmatprep.mubr.f32.mxu0 0.0
  %v1703 = vand.u32 %v1306, 4294901760
  %1704 = vmatmul.mubr.f32.gmra.mxu0 %v1703
  %v1705 = vpop.f32.mrf.mxu0
  %v1706 = vadd.f32 %v1513, %v1705
  %v1707 = vpop.f32.mrf.mxu0
  %1708 = vmatprep.mubr.f32.mxu0 0.0
  %v1709 = vand.u32 %v1309, 4294901760
  %1710 = vmatmul.mubr.f32.gmra.mxu0 %v1709
  %v1711 = vpop.f32.mrf.mxu0
  %v1712 = vadd.f32 %v1523, %v1711
  %v1713 = vpop.f32.mrf.mxu0
  %1714 = vmatprep.mubr.f32.mxu0 0.0
  %v1715 = vand.u32 %v1312, 4294901760
  %1716 = vmatmul.mubr.f32.gmra.mxu0 %v1715
  %v1717 = vpop.f32.mrf.mxu0
  %v1718 = vadd.f32 %v1533, %v1717
  %v1719 = vpop.f32.mrf.mxu0
  %1720 = vmatprep.mubr.f32.mxu0 0.0
  %v1721 = vand.u32 %v1315, 4294901760
  %1722 = vmatmul.mubr.f32.gmra.mxu0 %v1721
  %v1723 = vpop.f32.mrf.mxu0
  %v1724 = vadd.f32 %v1543, %v1723
  %v1725 = vpop.f32.mrf.mxu0
  %1726 = vdwg.mxu0
  %1727 = vmatprep.subr.mxu0 0.0
  %1728 = vmatpush1.msra.mxu0 0.0
  %1729 = vmatprep.subr.mxu0 0.0
  %1730 = vmatpush1.msra.mxu0 0.0
  %1731 = vmatprep.subr.mxu0 0.0
  %1732 = vmatpush1.msra.mxu0 0.0
  %1733 = vmatprep.subr.mxu0 0.0
  %1734 = vmatpush1.msra.mxu0 0.0
  %1735 = vmatprep.subr.mxu0 0.0
  %1736 = vmatpush1.msra.mxu0 0.0
  %1737 = vmatprep.subr.mxu0 0.0
  %1738 = vmatpush1.msra.mxu0 0.0
  %1739 = vmatprep.subr.mxu0 0.0
  %1740 = vmatpush1.msra.mxu0 0.0
  %1741 = vmatprep.subr.mxu0 0.0
  %1742 = vmatpush1.msra.mxu0 0.0
  %1743 = vmatprep.subr.mxu0 0.0
  %1744 = vmatpush1.msra.mxu0 0.0
  %1745 = vmatprep.subr.mxu0 0.0
  %1746 = vmatpush1.msra.mxu0 0.0
  %1747 = vmatprep.subr.mxu0 0.0
  %1748 = vmatpush1.msra.mxu0 0.0
  %1749 = vmatprep.subr.mxu0 0.0
  %1750 = vmatpush1.msra.mxu0 0.0
  %1751 = vmatprep.subr.mxu0 0.0
  %v1752 = vand.u32 %v85, 4294901760
  %v1753 = vsub.f32 %v85, %v1752
  %1754 = vmatpush1.msra.mxu0 %v1753
  %1755 = vmatprep.subr.mxu0 0.0
  %v1756 = vand.u32 %v84, 4294901760
  %v1757 = vsub.f32 %v84, %v1756
  %1758 = vmatpush1.msra.mxu0 %v1757
  %1759 = vmatprep.subr.mxu0 0.0
  %v1760 = vand.u32 %v83, 4294901760
  %v1761 = vsub.f32 %v83, %v1760
  %1762 = vmatpush1.msra.mxu0 %v1761
  %1763 = vmatprep.subr.mxu0 0.0
  %v1764 = vand.u32 %v82, 4294901760
  %v1765 = vsub.f32 %v82, %v1764
  %1766 = vmatpush1.msra.mxu0 %v1765
  %1767 = vmatprep.subr.mxu0 0.0
  %1768 = vmatpush2.msra.mxu0 0.0
  %1769 = vmatprep.subr.mxu0 0.0
  %1770 = vmatpush2.msra.mxu0 0.0
  %1771 = vmatprep.subr.mxu0 0.0
  %1772 = vmatpush2.msra.mxu0 0.0
  %1773 = vmatprep.subr.mxu0 0.0
  %1774 = vmatpush2.msra.mxu0 0.0
  %1775 = vmatprep.subr.mxu0 0.0
  %1776 = vmatpush2.msra.mxu0 0.0
  %1777 = vmatprep.subr.mxu0 0.0
  %1778 = vmatpush2.msra.mxu0 0.0
  %1779 = vmatprep.subr.mxu0 0.0
  %1780 = vmatpush2.msra.mxu0 0.0
  %1781 = vmatprep.subr.mxu0 0.0
  %1782 = vmatpush2.msra.mxu0 0.0
  %1783 = vmatprep.subr.mxu0 0.0
  %1784 = vmatpush2.msra.mxu0 0.0
  %1785 = vmatprep.subr.mxu0 0.0
  %1786 = vmatpush2.msra.mxu0 0.0
  %1787 = vmatprep.subr.mxu0 0.0
  %1788 = vmatpush2.msra.mxu0 0.0
  %1789 = vmatprep.subr.mxu0 0.0
  %1790 = vmatpush2.msra.mxu0 0.0
  %1791 = vmatprep.subr.mxu0 0.0
  %1792 = vmatpush2.msra.mxu0 0.0
  %1793 = vmatprep.subr.mxu0 0.0
  %1794 = vmatpush2.msra.mxu0 0.0
  %1795 = vmatprep.subr.mxu0 0.0
  %1796 = vmatpush2.msra.mxu0 0.0
  %1797 = vmatprep.subr.mxu0 0.0
  %1798 = vmatpush2.msra.mxu0 0.0
  %1799 = vmatprep.mubr.f32.mxu0 0.0
  %v1800 = vand.u32 %v1270, 4294901760
  %v1801 = vsub.f32 %v1270, %v1800
  %1802 = vmatmul.mubr.f32.gmra.mxu0 %v1801
  %v1803 = vpop.f32.mrf.mxu0
  %v1804 = vadd.f32 %v1634, %v1803
  %v1805 = vpop.f32.mrf.mxu0
  %1806 = vmatprep.mubr.f32.mxu0 0.0
  %v1807 = vand.u32 %v1273, 4294901760
  %v1808 = vsub.f32 %v1273, %v1807
  %1809 = vmatmul.mubr.f32.gmra.mxu0 %v1808
  %v1810 = vpop.f32.mrf.mxu0
  %v1811 = vadd.f32 %v1640, %v1810
  %v1812 = vpop.f32.mrf.mxu0
  %1813 = vmatprep.mubr.f32.mxu0 0.0
  %v1814 = vand.u32 %v1276, 4294901760
  %v1815 = vsub.f32 %v1276, %v1814
  %1816 = vmatmul.mubr.f32.gmra.mxu0 %v1815
  %v1817 = vpop.f32.mrf.mxu0
  %v1818 = vadd.f32 %v1646, %v1817
  %v1819 = vpop.f32.mrf.mxu0
  %1820 = vmatprep.mubr.f32.mxu0 0.0
  %v1821 = vand.u32 %v1279, 4294901760
  %v1822 = vsub.f32 %v1279, %v1821
  %1823 = vmatmul.mubr.f32.gmra.mxu0 %v1822
  %v1824 = vpop.f32.mrf.mxu0
  %v1825 = vadd.f32 %v1652, %v1824
  %v1826 = vpop.f32.mrf.mxu0
  %1827 = vmatprep.mubr.f32.mxu0 0.0
  %v1828 = vand.u32 %v1282, 4294901760
  %v1829 = vsub.f32 %v1282, %v1828
  %1830 = vmatmul.mubr.f32.gmra.mxu0 %v1829
  %v1831 = vpop.f32.mrf.mxu0
  %v1832 = vadd.f32 %v1658, %v1831
  %v1833 = vpop.f32.mrf.mxu0
  %1834 = vmatprep.mubr.f32.mxu0 0.0
  %v1835 = vand.u32 %v1285, 4294901760
  %v1836 = vsub.f32 %v1285, %v1835
  %1837 = vmatmul.mubr.f32.gmra.mxu0 %v1836
  %v1838 = vpop.f32.mrf.mxu0
  %v1839 = vadd.f32 %v1664, %v1838
  %v1840 = vpop.f32.mrf.mxu0
  %1841 = vmatprep.mubr.f32.mxu0 0.0
  %v1842 = vand.u32 %v1288, 4294901760
  %v1843 = vsub.f32 %v1288, %v1842
  %1844 = vmatmul.mubr.f32.gmra.mxu0 %v1843
  %v1845 = vpop.f32.mrf.mxu0
  %v1846 = vadd.f32 %v1670, %v1845
  %v1847 = vpop.f32.mrf.mxu0
  %1848 = vmatprep.mubr.f32.mxu0 0.0
  %v1849 = vand.u32 %v1291, 4294901760
  %v1850 = vsub.f32 %v1291, %v1849
  %1851 = vmatmul.mubr.f32.gmra.mxu0 %v1850
  %v1852 = vpop.f32.mrf.mxu0
  %v1853 = vadd.f32 %v1676, %v1852
  %v1854 = vpop.f32.mrf.mxu0
  %1855 = vmatprep.mubr.f32.mxu0 0.0
  %v1856 = vand.u32 %v1294, 4294901760
  %v1857 = vsub.f32 %v1294, %v1856
  %1858 = vmatmul.mubr.f32.gmra.mxu0 %v1857
  %v1859 = vpop.f32.mrf.mxu0
  %v1860 = vadd.f32 %v1682, %v1859
  %v1861 = vpop.f32.mrf.mxu0
  %1862 = vmatprep.mubr.f32.mxu0 0.0
  %v1863 = vand.u32 %v1297, 4294901760
  %v1864 = vsub.f32 %v1297, %v1863
  %1865 = vmatmul.mubr.f32.gmra.mxu0 %v1864
  %v1866 = vpop.f32.mrf.mxu0
  %v1867 = vadd.f32 %v1688, %v1866
  %v1868 = vpop.f32.mrf.mxu0
  %1869 = vmatprep.mubr.f32.mxu0 0.0
  %v1870 = vand.u32 %v1300, 4294901760
  %v1871 = vsub.f32 %v1300, %v1870
  %1872 = vmatmul.mubr.f32.gmra.mxu0 %v1871
  %v1873 = vpop.f32.mrf.mxu0
  %v1874 = vadd.f32 %v1694, %v1873
  %v1875 = vpop.f32.mrf.mxu0
  %1876 = vmatprep.mubr.f32.mxu0 0.0
  %v1877 = vand.u32 %v1303, 4294901760
  %v1878 = vsub.f32 %v1303, %v1877
  %1879 = vmatmul.mubr.f32.gmra.mxu0 %v1878
  %v1880 = vpop.f32.mrf.mxu0
  %v1881 = vadd.f32 %v1700, %v1880
  %v1882 = vpop.f32.mrf.mxu0
  %1883 = vmatprep.mubr.f32.mxu0 0.0
  %v1884 = vand.u32 %v1306, 4294901760
  %v1885 = vsub.f32 %v1306, %v1884
  %1886 = vmatmul.mubr.f32.gmra.mxu0 %v1885
  %v1887 = vpop.f32.mrf.mxu0
  %v1888 = vadd.f32 %v1706, %v1887
  %v1889 = vpop.f32.mrf.mxu0
  %1890 = vmatprep.mubr.f32.mxu0 0.0
  %v1891 = vand.u32 %v1309, 4294901760
  %v1892 = vsub.f32 %v1309, %v1891
  %1893 = vmatmul.mubr.f32.gmra.mxu0 %v1892
  %v1894 = vpop.f32.mrf.mxu0
  %v1895 = vadd.f32 %v1712, %v1894
  %v1896 = vpop.f32.mrf.mxu0
  %1897 = vmatprep.mubr.f32.mxu0 0.0
  %v1898 = vand.u32 %v1312, 4294901760
  %v1899 = vsub.f32 %v1312, %v1898
  %1900 = vmatmul.mubr.f32.gmra.mxu0 %v1899
  %v1901 = vpop.f32.mrf.mxu0
  %v1902 = vadd.f32 %v1718, %v1901
  %v1903 = vpop.f32.mrf.mxu0
  %1904 = vmatprep.mubr.f32.mxu0 0.0
  %v1905 = vand.u32 %v1315, 4294901760
  %v1906 = vsub.f32 %v1315, %v1905
  %1907 = vmatmul.mubr.f32.gmra.mxu0 %v1906
  %v1908 = vpop.f32.mrf.mxu0
  %v1909 = vadd.f32 %v1724, %v1908
  %v1910 = vpop.f32.mrf.mxu0
  %1911 = vdwg.mxu0
  %1912 = vmatprep.subr.mxu0 0.0
  %1913 = vmatpush1.msra.mxu0 0.0
  %1914 = vmatprep.subr.mxu0 0.0
  %1915 = vmatpush1.msra.mxu0 0.0
  %1916 = vmatprep.subr.mxu0 0.0
  %1917 = vmatpush1.msra.mxu0 0.0
  %1918 = vmatprep.subr.mxu0 0.0
  %1919 = vmatpush1.msra.mxu0 0.0
  %1920 = vmatprep.subr.mxu0 0.0
  %1921 = vmatpush1.msra.mxu0 0.0
  %1922 = vmatprep.subr.mxu0 0.0
  %1923 = vmatpush1.msra.mxu0 0.0
  %1924 = vmatprep.subr.mxu0 0.0
  %1925 = vmatpush1.msra.mxu0 0.0
  %1926 = vmatprep.subr.mxu0 0.0
  %1927 = vmatpush1.msra.mxu0 0.0
  %1928 = vmatprep.subr.mxu0 0.0
  %1929 = vmatpush1.msra.mxu0 0.0
  %1930 = vmatprep.subr.mxu0 0.0
  %1931 = vmatpush1.msra.mxu0 0.0
  %1932 = vmatprep.subr.mxu0 0.0
  %1933 = vmatpush1.msra.mxu0 0.0
  %1934 = vmatprep.subr.mxu0 0.0
  %1935 = vmatpush1.msra.mxu0 0.0
  %1936 = vmatprep.subr.mxu0 0.0
  %v1937 = vand.u32 %v85, 4294901760
  %1938 = vmatpush1.msra.mxu0 %v1937
  %1939 = vmatprep.subr.mxu0 0.0
  %v1940 = vand.u32 %v84, 4294901760
  %1941 = vmatpush1.msra.mxu0 %v1940
  %1942 = vmatprep.subr.mxu0 0.0
  %v1943 = vand.u32 %v83, 4294901760
  %1944 = vmatpush1.msra.mxu0 %v1943
  %1945 = vmatprep.subr.mxu0 0.0
  %v1946 = vand.u32 %v82, 4294901760
  %1947 = vmatpush1.msra.mxu0 %v1946
  %1948 = vmatprep.subr.mxu0 0.0
  %1949 = vmatpush2.msra.mxu0 0.0
  %1950 = vmatprep.subr.mxu0 0.0
  %1951 = vmatpush2.msra.mxu0 0.0
  %1952 = vmatprep.subr.mxu0 0.0
  %1953 = vmatpush2.msra.mxu0 0.0
  %1954 = vmatprep.subr.mxu0 0.0
  %1955 = vmatpush2.msra.mxu0 0.0
  %1956 = vmatprep.subr.mxu0 0.0
  %1957 = vmatpush2.msra.mxu0 0.0
  %1958 = vmatprep.subr.mxu0 0.0
  %1959 = vmatpush2.msra.mxu0 0.0
  %1960 = vmatprep.subr.mxu0 0.0
  %1961 = vmatpush2.msra.mxu0 0.0
  %1962 = vmatprep.subr.mxu0 0.0
  %1963 = vmatpush2.msra.mxu0 0.0
  %1964 = vmatprep.subr.mxu0 0.0
  %1965 = vmatpush2.msra.mxu0 0.0
  %1966 = vmatprep.subr.mxu0 0.0
  %1967 = vmatpush2.msra.mxu0 0.0
  %1968 = vmatprep.subr.mxu0 0.0
  %1969 = vmatpush2.msra.mxu0 0.0
  %1970 = vmatprep.subr.mxu0 0.0
  %1971 = vmatpush2.msra.mxu0 0.0
  %1972 = vmatprep.subr.mxu0 0.0
  %1973 = vmatpush2.msra.mxu0 0.0
  %1974 = vmatprep.subr.mxu0 0.0
  %1975 = vmatpush2.msra.mxu0 0.0
  %1976 = vmatprep.subr.mxu0 0.0
  %1977 = vmatpush2.msra.mxu0 0.0
  %1978 = vmatprep.subr.mxu0 0.0
  %1979 = vmatpush2.msra.mxu0 0.0
  %1980 = vmatprep.mubr.f32.mxu0 0.0
  %v1981 = vand.u32 %v1270, 4294901760
  %v1982 = vsub.f32 %v1270, %v1981
  %v1983 = vand.u32 %v1982, 4294901760
  %1984 = vmatmul.mubr.f32.gmra.mxu0 %v1983
  %v1985 = vpop.f32.mrf.mxu0
  %v1986 = vadd.f32 %v1804, %v1985
  %v1987 = vpop.f32.mrf.mxu0
  %1988 = vmatprep.mubr.f32.mxu0 0.0
  %v1989 = vand.u32 %v1273, 4294901760
  %v1990 = vsub.f32 %v1273, %v1989
  %v1991 = vand.u32 %v1990, 4294901760
  %1992 = vmatmul.mubr.f32.gmra.mxu0 %v1991
  %v1993 = vpop.f32.mrf.mxu0
  %v1994 = vadd.f32 %v1811, %v1993
  %v1995 = vpop.f32.mrf.mxu0
  %1996 = vmatprep.mubr.f32.mxu0 0.0
  %v1997 = vand.u32 %v1276, 4294901760
  %v1998 = vsub.f32 %v1276, %v1997
  %v1999 = vand.u32 %v1998, 4294901760
  %2000 = vmatmul.mubr.f32.gmra.mxu0 %v1999
  %v2001 = vpop.f32.mrf.mxu0
  %v2002 = vadd.f32 %v1818, %v2001
  %v2003 = vpop.f32.mrf.mxu0
  %2004 = vmatprep.mubr.f32.mxu0 0.0
  %v2005 = vand.u32 %v1279, 4294901760
  %v2006 = vsub.f32 %v1279, %v2005
  %v2007 = vand.u32 %v2006, 4294901760
  %2008 = vmatmul.mubr.f32.gmra.mxu0 %v2007
  %v2009 = vpop.f32.mrf.mxu0
  %v2010 = vadd.f32 %v1825, %v2009
  %v2011 = vpop.f32.mrf.mxu0
  %2012 = vmatprep.mubr.f32.mxu0 0.0
  %v2013 = vand.u32 %v1282, 4294901760
  %v2014 = vsub.f32 %v1282, %v2013
  %v2015 = vand.u32 %v2014, 4294901760
  %2016 = vmatmul.mubr.f32.gmra.mxu0 %v2015
  %v2017 = vpop.f32.mrf.mxu0
  %v2018 = vadd.f32 %v1832, %v2017
  %v2019 = vpop.f32.mrf.mxu0
  %2020 = vmatprep.mubr.f32.mxu0 0.0
  %v2021 = vand.u32 %v1285, 4294901760
  %v2022 = vsub.f32 %v1285, %v2021
  %v2023 = vand.u32 %v2022, 4294901760
  %2024 = vmatmul.mubr.f32.gmra.mxu0 %v2023
  %v2025 = vpop.f32.mrf.mxu0
  %v2026 = vadd.f32 %v1839, %v2025
  %v2027 = vpop.f32.mrf.mxu0
  %2028 = vmatprep.mubr.f32.mxu0 0.0
  %v2029 = vand.u32 %v1288, 4294901760
  %v2030 = vsub.f32 %v1288, %v2029
  %v2031 = vand.u32 %v2030, 4294901760
  %2032 = vmatmul.mubr.f32.gmra.mxu0 %v2031
  %v2033 = vpop.f32.mrf.mxu0
  %v2034 = vadd.f32 %v1846, %v2033
  %v2035 = vpop.f32.mrf.mxu0
  %2036 = vmatprep.mubr.f32.mxu0 0.0
  %v2037 = vand.u32 %v1291, 4294901760
  %v2038 = vsub.f32 %v1291, %v2037
  %v2039 = vand.u32 %v2038, 4294901760
  %2040 = vmatmul.mubr.f32.gmra.mxu0 %v2039
  %v2041 = vpop.f32.mrf.mxu0
  %v2042 = vadd.f32 %v1853, %v2041
  %v2043 = vpop.f32.mrf.mxu0
  %2044 = vmatprep.mubr.f32.mxu0 0.0
  %v2045 = vand.u32 %v1294, 4294901760
  %v2046 = vsub.f32 %v1294, %v2045
  %v2047 = vand.u32 %v2046, 4294901760
  %2048 = vmatmul.mubr.f32.gmra.mxu0 %v2047
  %v2049 = vpop.f32.mrf.mxu0
  %v2050 = vadd.f32 %v1860, %v2049
  %v2051 = vpop.f32.mrf.mxu0
  %2052 = vmatprep.mubr.f32.mxu0 0.0
  %v2053 = vand.u32 %v1297, 4294901760
  %v2054 = vsub.f32 %v1297, %v2053
  %v2055 = vand.u32 %v2054, 4294901760
  %2056 = vmatmul.mubr.f32.gmra.mxu0 %v2055
  %v2057 = vpop.f32.mrf.mxu0
  %v2058 = vadd.f32 %v1867, %v2057
  %v2059 = vpop.f32.mrf.mxu0
  %2060 = vmatprep.mubr.f32.mxu0 0.0
  %v2061 = vand.u32 %v1300, 4294901760
  %v2062 = vsub.f32 %v1300, %v2061
  %v2063 = vand.u32 %v2062, 4294901760
  %2064 = vmatmul.mubr.f32.gmra.mxu0 %v2063
  %v2065 = vpop.f32.mrf.mxu0
  %v2066 = vadd.f32 %v1874, %v2065
  %v2067 = vpop.f32.mrf.mxu0
  %2068 = vmatprep.mubr.f32.mxu0 0.0
  %v2069 = vand.u32 %v1303, 4294901760
  %v2070 = vsub.f32 %v1303, %v2069
  %v2071 = vand.u32 %v2070, 4294901760
  %2072 = vmatmul.mubr.f32.gmra.mxu0 %v2071
  %v2073 = vpop.f32.mrf.mxu0
  %v2074 = vadd.f32 %v1881, %v2073
  %v2075 = vpop.f32.mrf.mxu0
  %2076 = vmatprep.mubr.f32.mxu0 0.0
  %v2077 = vand.u32 %v1306, 4294901760
  %v2078 = vsub.f32 %v1306, %v2077
  %v2079 = vand.u32 %v2078, 4294901760
  %2080 = vmatmul.mubr.f32.gmra.mxu0 %v2079
  %v2081 = vpop.f32.mrf.mxu0
  %v2082 = vadd.f32 %v1888, %v2081
  %v2083 = vpop.f32.mrf.mxu0
  %2084 = vmatprep.mubr.f32.mxu0 0.0
  %v2085 = vand.u32 %v1309, 4294901760
  %v2086 = vsub.f32 %v1309, %v2085
  %v2087 = vand.u32 %v2086, 4294901760
  %2088 = vmatmul.mubr.f32.gmra.mxu0 %v2087
  %v2089 = vpop.f32.mrf.mxu0
  %v2090 = vadd.f32 %v1895, %v2089
  %v2091 = vpop.f32.mrf.mxu0
  %2092 = vmatprep.mubr.f32.mxu0 0.0
  %v2093 = vand.u32 %v1312, 4294901760
  %v2094 = vsub.f32 %v1312, %v2093
  %v2095 = vand.u32 %v2094, 4294901760
  %2096 = vmatmul.mubr.f32.gmra.mxu0 %v2095
  %v2097 = vpop.f32.mrf.mxu0
  %v2098 = vadd.f32 %v1902, %v2097
  %v2099 = vpop.f32.mrf.mxu0
  %2100 = vmatprep.mubr.f32.mxu0 0.0
  %v2101 = vand.u32 %v1315, 4294901760
  %v2102 = vsub.f32 %v1315, %v2101
  %v2103 = vand.u32 %v2102, 4294901760
  %2104 = vmatmul.mubr.f32.gmra.mxu0 %v2103
  %v2105 = vpop.f32.mrf.mxu0
  %v2106 = vadd.f32 %v1909, %v2105
  %v2107 = vpop.f32.mrf.mxu0
  %2108 = vdwg.mxu0
  %2109 = vmatprep.subr.mxu0 0.0
  %2110 = vmatpush1.msra.mxu0 0.0
  %2111 = vmatprep.subr.mxu0 0.0
  %2112 = vmatpush1.msra.mxu0 0.0
  %2113 = vmatprep.subr.mxu0 0.0
  %2114 = vmatpush1.msra.mxu0 0.0
  %2115 = vmatprep.subr.mxu0 0.0
  %2116 = vmatpush1.msra.mxu0 0.0
  %2117 = vmatprep.subr.mxu0 0.0
  %2118 = vmatpush1.msra.mxu0 0.0
  %2119 = vmatprep.subr.mxu0 0.0
  %2120 = vmatpush1.msra.mxu0 0.0
  %2121 = vmatprep.subr.mxu0 0.0
  %2122 = vmatpush1.msra.mxu0 0.0
  %2123 = vmatprep.subr.mxu0 0.0
  %2124 = vmatpush1.msra.mxu0 0.0
  %2125 = vmatprep.subr.mxu0 0.0
  %2126 = vmatpush1.msra.mxu0 0.0
  %2127 = vmatprep.subr.mxu0 0.0
  %2128 = vmatpush1.msra.mxu0 0.0
  %2129 = vmatprep.subr.mxu0 0.0
  %2130 = vmatpush1.msra.mxu0 0.0
  %2131 = vmatprep.subr.mxu0 0.0
  %2132 = vmatpush1.msra.mxu0 0.0
  %2133 = vmatprep.subr.mxu0 0.0
  %v2134 = vand.u32 %v85, 4294901760
  %v2135 = vsub.f32 %v85, %v2134
  %v2136 = vand.u32 %v2135, 4294901760
  %2137 = vmatpush1.msra.mxu0 %v2136
  %2138 = vmatprep.subr.mxu0 0.0
  %v2139 = vand.u32 %v84, 4294901760
  %v2140 = vsub.f32 %v84, %v2139
  %v2141 = vand.u32 %v2140, 4294901760
  %2142 = vmatpush1.msra.mxu0 %v2141
  %2143 = vmatprep.subr.mxu0 0.0
  %v2144 = vand.u32 %v83, 4294901760
  %v2145 = vsub.f32 %v83, %v2144
  %v2146 = vand.u32 %v2145, 4294901760
  %2147 = vmatpush1.msra.mxu0 %v2146
  %2148 = vmatprep.subr.mxu0 0.0
  %v2149 = vand.u32 %v82, 4294901760
  %v2150 = vsub.f32 %v82, %v2149
  %v2151 = vand.u32 %v2150, 4294901760
  %2152 = vmatpush1.msra.mxu0 %v2151
  %2153 = vmatprep.subr.mxu0 0.0
  %2154 = vmatpush2.msra.mxu0 0.0
  %2155 = vmatprep.subr.mxu0 0.0
  %2156 = vmatpush2.msra.mxu0 0.0
  %2157 = vmatprep.subr.mxu0 0.0
  %2158 = vmatpush2.msra.mxu0 0.0
  %2159 = vmatprep.subr.mxu0 0.0
  %2160 = vmatpush2.msra.mxu0 0.0
  %2161 = vmatprep.subr.mxu0 0.0
  %2162 = vmatpush2.msra.mxu0 0.0
  %2163 = vmatprep.subr.mxu0 0.0
  %2164 = vmatpush2.msra.mxu0 0.0
  %2165 = vmatprep.subr.mxu0 0.0
  %2166 = vmatpush2.msra.mxu0 0.0
  %2167 = vmatprep.subr.mxu0 0.0
  %2168 = vmatpush2.msra.mxu0 0.0
  %2169 = vmatprep.subr.mxu0 0.0
  %2170 = vmatpush2.msra.mxu0 0.0
  %2171 = vmatprep.subr.mxu0 0.0
  %2172 = vmatpush2.msra.mxu0 0.0
  %2173 = vmatprep.subr.mxu0 0.0
  %2174 = vmatpush2.msra.mxu0 0.0
  %2175 = vmatprep.subr.mxu0 0.0
  %2176 = vmatpush2.msra.mxu0 0.0
  %2177 = vmatprep.subr.mxu0 0.0
  %2178 = vmatpush2.msra.mxu0 0.0
  %2179 = vmatprep.subr.mxu0 0.0
  %2180 = vmatpush2.msra.mxu0 0.0
  %2181 = vmatprep.subr.mxu0 0.0
  %2182 = vmatpush2.msra.mxu0 0.0
  %2183 = vmatprep.subr.mxu0 0.0
  %2184 = vmatpush2.msra.mxu0 0.0
  %2185 = vmatprep.mubr.f32.mxu0 0.0
  %v2186 = vand.u32 %v1270, 4294901760
  %2187 = vmatmul.mubr.f32.gmra.mxu0 %v2186
  %v2188 = vpop.f32.mrf.mxu0
  %v2189 = vadd.f32 %v1986, %v2188
  %v2190 = vpop.f32.mrf.mxu0
  %2191 = vmatprep.mubr.f32.mxu0 0.0
  %v2192 = vand.u32 %v1273, 4294901760
  %2193 = vmatmul.mubr.f32.gmra.mxu0 %v2192
  %v2194 = vpop.f32.mrf.mxu0
  %v2195 = vadd.f32 %v1994, %v2194
  %v2196 = vpop.f32.mrf.mxu0
  %2197 = vmatprep.mubr.f32.mxu0 0.0
  %v2198 = vand.u32 %v1276, 4294901760
  %2199 = vmatmul.mubr.f32.gmra.mxu0 %v2198
  %v2200 = vpop.f32.mrf.mxu0
  %v2201 = vadd.f32 %v2002, %v2200
  %v2202 = vpop.f32.mrf.mxu0
  %2203 = vmatprep.mubr.f32.mxu0 0.0
  %v2204 = vand.u32 %v1279, 4294901760
  %2205 = vmatmul.mubr.f32.gmra.mxu0 %v2204
  %v2206 = vpop.f32.mrf.mxu0
  %v2207 = vadd.f32 %v2010, %v2206
  %v2208 = vpop.f32.mrf.mxu0
  %2209 = vmatprep.mubr.f32.mxu0 0.0
  %v2210 = vand.u32 %v1282, 4294901760
  %2211 = vmatmul.mubr.f32.gmra.mxu0 %v2210
  %v2212 = vpop.f32.mrf.mxu0
  %v2213 = vadd.f32 %v2018, %v2212
  %v2214 = vpop.f32.mrf.mxu0
  %2215 = vmatprep.mubr.f32.mxu0 0.0
  %v2216 = vand.u32 %v1285, 4294901760
  %2217 = vmatmul.mubr.f32.gmra.mxu0 %v2216
  %v2218 = vpop.f32.mrf.mxu0
  %v2219 = vadd.f32 %v2026, %v2218
  %v2220 = vpop.f32.mrf.mxu0
  %2221 = vmatprep.mubr.f32.mxu0 0.0
  %v2222 = vand.u32 %v1288, 4294901760
  %2223 = vmatmul.mubr.f32.gmra.mxu0 %v2222
  %v2224 = vpop.f32.mrf.mxu0
  %v2225 = vadd.f32 %v2034, %v2224
  %v2226 = vpop.f32.mrf.mxu0
  %2227 = vmatprep.mubr.f32.mxu0 0.0
  %v2228 = vand.u32 %v1291, 4294901760
  %2229 = vmatmul.mubr.f32.gmra.mxu0 %v2228
  %v2230 = vpop.f32.mrf.mxu0
  %v2231 = vadd.f32 %v2042, %v2230
  %v2232 = vpop.f32.mrf.mxu0
  %2233 = vmatprep.mubr.f32.mxu0 0.0
  %v2234 = vand.u32 %v1294, 4294901760
  %2235 = vmatmul.mubr.f32.gmra.mxu0 %v2234
  %v2236 = vpop.f32.mrf.mxu0
  %v2237 = vadd.f32 %v2050, %v2236
  %v2238 = vpop.f32.mrf.mxu0
  %2239 = vmatprep.mubr.f32.mxu0 0.0
  %v2240 = vand.u32 %v1297, 4294901760
  %2241 = vmatmul.mubr.f32.gmra.mxu0 %v2240
  %v2242 = vpop.f32.mrf.mxu0
  %v2243 = vadd.f32 %v2058, %v2242
  %v2244 = vpop.f32.mrf.mxu0
  %2245 = vmatprep.mubr.f32.mxu0 0.0
  %v2246 = vand.u32 %v1300, 4294901760
  %2247 = vmatmul.mubr.f32.gmra.mxu0 %v2246
  %v2248 = vpop.f32.mrf.mxu0
  %v2249 = vadd.f32 %v2066, %v2248
  %v2250 = vpop.f32.mrf.mxu0
  %2251 = vmatprep.mubr.f32.mxu0 0.0
  %v2252 = vand.u32 %v1303, 4294901760
  %2253 = vmatmul.mubr.f32.gmra.mxu0 %v2252
  %v2254 = vpop.f32.mrf.mxu0
  %v2255 = vadd.f32 %v2074, %v2254
  %v2256 = vpop.f32.mrf.mxu0
  %2257 = vmatprep.mubr.f32.mxu0 0.0
  %v2258 = vand.u32 %v1306, 4294901760
  %2259 = vmatmul.mubr.f32.gmra.mxu0 %v2258
  %v2260 = vpop.f32.mrf.mxu0
  %v2261 = vadd.f32 %v2082, %v2260
  %v2262 = vpop.f32.mrf.mxu0
  %2263 = vmatprep.mubr.f32.mxu0 0.0
  %v2264 = vand.u32 %v1309, 4294901760
  %2265 = vmatmul.mubr.f32.gmra.mxu0 %v2264
  %v2266 = vpop.f32.mrf.mxu0
  %v2267 = vadd.f32 %v2090, %v2266
  %v2268 = vpop.f32.mrf.mxu0
  %2269 = vmatprep.mubr.f32.mxu0 0.0
  %v2270 = vand.u32 %v1312, 4294901760
  %2271 = vmatmul.mubr.f32.gmra.mxu0 %v2270
  %v2272 = vpop.f32.mrf.mxu0
  %v2273 = vadd.f32 %v2098, %v2272
  %v2274 = vpop.f32.mrf.mxu0
  %2275 = vmatprep.mubr.f32.mxu0 0.0
  %v2276 = vand.u32 %v1315, 4294901760
  %2277 = vmatmul.mubr.f32.gmra.mxu0 %v2276
  %v2278 = vpop.f32.mrf.mxu0
  %v2279 = vadd.f32 %v2106, %v2278
  %v2280 = vpop.f32.mrf.mxu0
  %2281 = vdwg.mxu0
  %2282 = vmatprep.subr.mxu0 0.0
  %2283 = vmatpush1.msra.mxu0 0.0
  %2284 = vmatprep.subr.mxu0 0.0
  %2285 = vmatpush1.msra.mxu0 0.0
  %2286 = vmatprep.subr.mxu0 0.0
  %2287 = vmatpush1.msra.mxu0 0.0
  %2288 = vmatprep.subr.mxu0 0.0
  %2289 = vmatpush1.msra.mxu0 0.0
  %2290 = vmatprep.subr.mxu0 0.0
  %2291 = vmatpush1.msra.mxu0 0.0
  %2292 = vmatprep.subr.mxu0 0.0
  %2293 = vmatpush1.msra.mxu0 0.0
  %2294 = vmatprep.subr.mxu0 0.0
  %2295 = vmatpush1.msra.mxu0 0.0
  %2296 = vmatprep.subr.mxu0 0.0
  %2297 = vmatpush1.msra.mxu0 0.0
  %2298 = vmatprep.subr.mxu0 0.0
  %2299 = vmatpush1.msra.mxu0 0.0
  %2300 = vmatprep.subr.mxu0 0.0
  %2301 = vmatpush1.msra.mxu0 0.0
  %2302 = vmatprep.subr.mxu0 0.0
  %2303 = vmatpush1.msra.mxu0 0.0
  %2304 = vmatprep.subr.mxu0 0.0
  %2305 = vmatpush1.msra.mxu0 0.0
  %2306 = vmatprep.subr.mxu0 0.0
  %v2307 = vand.u32 %v85, 4294901760
  %2308 = vmatpush1.msra.mxu0 %v2307
  %2309 = vmatprep.subr.mxu0 0.0
  %v2310 = vand.u32 %v84, 4294901760
  %2311 = vmatpush1.msra.mxu0 %v2310
  %2312 = vmatprep.subr.mxu0 0.0
  %v2313 = vand.u32 %v83, 4294901760
  %2314 = vmatpush1.msra.mxu0 %v2313
  %2315 = vmatprep.subr.mxu0 0.0
  %v2316 = vand.u32 %v82, 4294901760
  %2317 = vmatpush1.msra.mxu0 %v2316
  %2318 = vmatprep.subr.mxu0 0.0
  %2319 = vmatpush2.msra.mxu0 0.0
  %2320 = vmatprep.subr.mxu0 0.0
  %2321 = vmatpush2.msra.mxu0 0.0
  %2322 = vmatprep.subr.mxu0 0.0
  %2323 = vmatpush2.msra.mxu0 0.0
  %2324 = vmatprep.subr.mxu0 0.0
  %2325 = vmatpush2.msra.mxu0 0.0
  %2326 = vmatprep.subr.mxu0 0.0
  %2327 = vmatpush2.msra.mxu0 0.0
  %2328 = vmatprep.subr.mxu0 0.0
  %2329 = vmatpush2.msra.mxu0 0.0
  %2330 = vmatprep.subr.mxu0 0.0
  %2331 = vmatpush2.msra.mxu0 0.0
  %2332 = vmatprep.subr.mxu0 0.0
  %2333 = vmatpush2.msra.mxu0 0.0
  %2334 = vmatprep.subr.mxu0 0.0
  %2335 = vmatpush2.msra.mxu0 0.0
  %2336 = vmatprep.subr.mxu0 0.0
  %2337 = vmatpush2.msra.mxu0 0.0
  %2338 = vmatprep.subr.mxu0 0.0
  %2339 = vmatpush2.msra.mxu0 0.0
  %2340 = vmatprep.subr.mxu0 0.0
  %2341 = vmatpush2.msra.mxu0 0.0
  %2342 = vmatprep.subr.mxu0 0.0
  %2343 = vmatpush2.msra.mxu0 0.0
  %2344 = vmatprep.subr.mxu0 0.0
  %2345 = vmatpush2.msra.mxu0 0.0
  %2346 = vmatprep.subr.mxu0 0.0
  %2347 = vmatpush2.msra.mxu0 0.0
  %2348 = vmatprep.subr.mxu0 0.0
  %2349 = vmatpush2.msra.mxu0 0.0
  %2350 = vmatprep.mubr.f32.mxu0 0.0
  %v2351 = vand.u32 %v1270, 4294901760
  %2352 = vmatmul.mubr.f32.gmra.mxu0 %v2351
  %v2353 = vpop.f32.mrf.mxu0
  %v2354 = vadd.f32 %v2189, %v2353
  %v2355 = vpop.f32.mrf.mxu0
  %2356 = vmatprep.mubr.f32.mxu0 0.0
  %v2357 = vand.u32 %v1273, 4294901760
  %2358 = vmatmul.mubr.f32.gmra.mxu0 %v2357
  %v2359 = vpop.f32.mrf.mxu0
  %v2360 = vadd.f32 %v2195, %v2359
  %v2361 = vpop.f32.mrf.mxu0
  %2362 = vmatprep.mubr.f32.mxu0 0.0
  %v2363 = vand.u32 %v1276, 4294901760
  %2364 = vmatmul.mubr.f32.gmra.mxu0 %v2363
  %v2365 = vpop.f32.mrf.mxu0
  %v2366 = vadd.f32 %v2201, %v2365
  %v2367 = vpop.f32.mrf.mxu0
  %2368 = vmatprep.mubr.f32.mxu0 0.0
  %v2369 = vand.u32 %v1279, 4294901760
  %2370 = vmatmul.mubr.f32.gmra.mxu0 %v2369
  %v2371 = vpop.f32.mrf.mxu0
  %v2372 = vadd.f32 %v2207, %v2371
  %v2373 = vpop.f32.mrf.mxu0
  %2374 = vmatprep.mubr.f32.mxu0 0.0
  %v2375 = vand.u32 %v1282, 4294901760
  %2376 = vmatmul.mubr.f32.gmra.mxu0 %v2375
  %v2377 = vpop.f32.mrf.mxu0
  %v2378 = vadd.f32 %v2213, %v2377
  %v2379 = vpop.f32.mrf.mxu0
  %2380 = vmatprep.mubr.f32.mxu0 0.0
  %v2381 = vand.u32 %v1285, 4294901760
  %2382 = vmatmul.mubr.f32.gmra.mxu0 %v2381
  %v2383 = vpop.f32.mrf.mxu0
  %v2384 = vadd.f32 %v2219, %v2383
  %v2385 = vpop.f32.mrf.mxu0
  %2386 = vmatprep.mubr.f32.mxu0 0.0
  %v2387 = vand.u32 %v1288, 4294901760
  %2388 = vmatmul.mubr.f32.gmra.mxu0 %v2387
  %v2389 = vpop.f32.mrf.mxu0
  %v2390 = vadd.f32 %v2225, %v2389
  %v2391 = vpop.f32.mrf.mxu0
  %2392 = vmatprep.mubr.f32.mxu0 0.0
  %v2393 = vand.u32 %v1291, 4294901760
  %2394 = vmatmul.mubr.f32.gmra.mxu0 %v2393
  %v2395 = vpop.f32.mrf.mxu0
  %v2396 = vadd.f32 %v2231, %v2395
  %v2397 = vpop.f32.mrf.mxu0
  %2398 = vmatprep.mubr.f32.mxu0 0.0
  %v2399 = vand.u32 %v1294, 4294901760
  %2400 = vmatmul.mubr.f32.gmra.mxu0 %v2399
  %v2401 = vpop.f32.mrf.mxu0
  %v2402 = vadd.f32 %v2237, %v2401
  %v2403 = vpop.f32.mrf.mxu0
  %2404 = vmatprep.mubr.f32.mxu0 0.0
  %v2405 = vand.u32 %v1297, 4294901760
  %2406 = vmatmul.mubr.f32.gmra.mxu0 %v2405
  %v2407 = vpop.f32.mrf.mxu0
  %v2408 = vadd.f32 %v2243, %v2407
  %v2409 = vpop.f32.mrf.mxu0
  %2410 = vmatprep.mubr.f32.mxu0 0.0
  %v2411 = vand.u32 %v1300, 4294901760
  %2412 = vmatmul.mubr.f32.gmra.mxu0 %v2411
  %v2413 = vpop.f32.mrf.mxu0
  %v2414 = vadd.f32 %v2249, %v2413
  %v2415 = vpop.f32.mrf.mxu0
  %2416 = vmatprep.mubr.f32.mxu0 0.0
  %v2417 = vand.u32 %v1303, 4294901760
  %2418 = vmatmul.mubr.f32.gmra.mxu0 %v2417
  %v2419 = vpop.f32.mrf.mxu0
  %v2420 = vadd.f32 %v2255, %v2419
  %v2421 = vpop.f32.mrf.mxu0
  %2422 = vmatprep.mubr.f32.mxu0 0.0
  %v2423 = vand.u32 %v1306, 4294901760
  %2424 = vmatmul.mubr.f32.gmra.mxu0 %v2423
  %v2425 = vpop.f32.mrf.mxu0
  %v2426 = vadd.f32 %v2261, %v2425
  %v2427 = vpop.f32.mrf.mxu0
  %2428 = vmatprep.mubr.f32.mxu0 0.0
  %v2429 = vand.u32 %v1309, 4294901760
  %2430 = vmatmul.mubr.f32.gmra.mxu0 %v2429
  %v2431 = vpop.f32.mrf.mxu0
  %v2432 = vadd.f32 %v2267, %v2431
  %v2433 = vpop.f32.mrf.mxu0
  %2434 = vmatprep.mubr.f32.mxu0 0.0
  %v2435 = vand.u32 %v1312, 4294901760
  %2436 = vmatmul.mubr.f32.gmra.mxu0 %v2435
  %v2437 = vpop.f32.mrf.mxu0
  %v2438 = vadd.f32 %v2273, %v2437
  %v2439 = vpop.f32.mrf.mxu0
  %2440 = vmatprep.mubr.f32.mxu0 0.0
  %v2441 = vand.u32 %v1315, 4294901760
  %2442 = vmatmul.mubr.f32.gmra.mxu0 %v2441
  %v2443 = vpop.f32.mrf.mxu0
  %v2444 = vadd.f32 %v2279, %v2443
  %v2445 = vpop.f32.mrf.mxu0
  %2446 = vdwg.mxu0
  %v2447 = vld [vmem:[%s3] sm:$0x1]
  %v2449 = vlaneseq
  %v2450 = vshrl.u32 %v2449, 7
  %v2451 = vsub.s32 0, %v2450
  %v2452 = vrot.slane %v2447, %v2451
  %v2454 = vadd.f32 %v2354, %v2452
  %v2455 = vadd.f32 %v2360, %v2452
  %v2456 = vadd.f32 %v2366, %v2452
  %v2457 = vadd.f32 %v2372, %v2452
  %v2458 = vadd.f32 %v2378, %v2452
  %v2459 = vadd.f32 %v2384, %v2452
  %v2460 = vadd.f32 %v2390, %v2452
  %v2461 = vadd.f32 %v2396, %v2452
  %v2462 = vadd.f32 %v2402, %v2452
  %v2463 = vadd.f32 %v2408, %v2452
  %v2464 = vadd.f32 %v2414, %v2452
  %v2465 = vadd.f32 %v2420, %v2452
  %v2466 = vadd.f32 %v2426, %v2452
  %v2467 = vadd.f32 %v2432, %v2452
  %v2468 = vadd.f32 %v2438, %v2452
  %v2469 = vadd.f32 %v2444, %v2452
  %v2486 = vrot.slane %v2455, 7
  %vm2487 = vcmask 1041409
  %v2488 = vsel %vm2487, %v2486, %v2454
  %v2489 = vrot.slane %v2456, 6
  %vm2490 = vcmask 1042434
  %v2491 = vsel %vm2490, %v2489, %v2488
  %v2492 = vrot.slane %v2457, 5
  %vm2493 = vcmask 1043459
  %v2494 = vsel %vm2493, %v2492, %v2491
  %v2495 = vrot.slane %v2458, 4
  %vm2496 = vcmask 1044484
  %v2497 = vsel %vm2496, %v2495, %v2494
  %v2498 = vrot.slane %v2459, 3
  %vm2499 = vcmask 1045509
  %v2500 = vsel %vm2499, %v2498, %v2497
  %v2501 = vrot.slane %v2460, 2
  %vm2502 = vcmask 1046534
  %v2503 = vsel %vm2502, %v2501, %v2500
  %v2504 = vrot.slane %v2461, 1
  %vm2505 = vcmask 1047559
  %v2506 = vsel %vm2505, %v2504, %v2503
  %v2507 = vrot.slane %v2463, 7
  %v2508 = vsel %vm2487, %v2507, %v2462
  %v2509 = vrot.slane %v2464, 6
  %v2510 = vsel %vm2490, %v2509, %v2508
  %v2511 = vrot.slane %v2465, 5
  %v2512 = vsel %vm2493, %v2511, %v2510
  %v2513 = vrot.slane %v2466, 4
  %v2514 = vsel %vm2496, %v2513, %v2512
  %v2515 = vrot.slane %v2467, 3
  %v2516 = vsel %vm2499, %v2515, %v2514
  %v2517 = vrot.slane %v2468, 2
  %v2518 = vsel %vm2502, %v2517, %v2516
  %v2519 = vrot.slane %v2469, 1
  %v2520 = vsel %vm2505, %v2519, %v2518
  %2523 = vst.msk [vmem:[%s4] sm:$0xff] %vm90, %v2506
  %2524 = vst.msk [vmem:[%s4 + $0x10] sm:$0xff] %vm90, %v2520
  %v2525 = vrot.slane %v2454, 1
  %v2526 = vsel %vm2487, %v2455, %v2525
  %v2527 = vrot.slane %v2456, 7
  %v2528 = vsel %vm2490, %v2527, %v2526
  %v2529 = vrot.slane %v2457, 6
  %v2530 = vsel %vm2493, %v2529, %v2528
  %v2531 = vrot.slane %v2458, 5
  %v2532 = vsel %vm2496, %v2531, %v2530
  %v2533 = vrot.slane %v2459, 4
  %v2534 = vsel %vm2499, %v2533, %v2532
  %v2535 = vrot.slane %v2460, 3
  %v2536 = vsel %vm2502, %v2535, %v2534
  %v2537 = vrot.slane %v2461, 2
  %v2538 = vsel %vm2505, %v2537, %v2536
  %v2539 = vrot.slane %v2462, 1
  %v2540 = vsel %vm2487, %v2463, %v2539
  %v2541 = vrot.slane %v2464, 7
  %v2542 = vsel %vm2490, %v2541, %v2540
  %v2543 = vrot.slane %v2465, 6
  %v2544 = vsel %vm2493, %v2543, %v2542
  %v2545 = vrot.slane %v2466, 5
  %v2546 = vsel %vm2496, %v2545, %v2544
  %v2547 = vrot.slane %v2467, 4
  %v2548 = vsel %vm2499, %v2547, %v2546
  %v2549 = vrot.slane %v2468, 3
  %v2550 = vsel %vm2502, %v2549, %v2548
  %v2551 = vrot.slane %v2469, 2
  %v2552 = vsel %vm2505, %v2551, %v2550
  %2553 = vrot.lane.b32.xlu0 %v2538, 32
  %v2554 = vpop.permute.xlu0 %2553
  %2555 = vrot.lane.b32.xlu0 %v2552, 32
  %v2556 = vpop.permute.xlu0 %2555
  %vm2559 = vcmask 523520
  %2560 = vst.msk [vmem:[%s4] sm:$0xff] %vm2559, %v2554
  %2561 = vst.msk [vmem:[%s4 + $0x10] sm:$0xff] %vm2559, %v2556
  %v2562 = vrot.slane %v2454, 2
  %v2563 = vrot.slane %v2455, 1
  %v2564 = vsel %vm2487, %v2563, %v2562
  %v2565 = vsel %vm2490, %v2456, %v2564
  %v2566 = vrot.slane %v2457, 7
  %v2567 = vsel %vm2493, %v2566, %v2565
  %v2568 = vrot.slane %v2458, 6
  %v2569 = vsel %vm2496, %v2568, %v2567
  %v2570 = vrot.slane %v2459, 5
  %v2571 = vsel %vm2499, %v2570, %v2569
  %v2572 = vrot.slane %v2460, 4
  %v2573 = vsel %vm2502, %v2572, %v2571
  %v2574 = vrot.slane %v2461, 3
  %v2575 = vsel %vm2505, %v2574, %v2573
  %v2576 = vrot.slane %v2462, 2
  %v2577 = vrot.slane %v2463, 1
  %v2578 = vsel %vm2487, %v2577, %v2576
  %v2579 = vsel %vm2490, %v2464, %v2578
  %v2580 = vrot.slane %v2465, 7
  %v2581 = vsel %vm2493, %v2580, %v2579
  %v2582 = vrot.slane %v2466, 6
  %v2583 = vsel %vm2496, %v2582, %v2581
  %v2584 = vrot.slane %v2467, 5
  %v2585 = vsel %vm2499, %v2584, %v2583
  %v2586 = vrot.slane %v2468, 4
  %v2587 = vsel %vm2502, %v2586, %v2585
  %v2588 = vrot.slane %v2469, 3
  %v2589 = vsel %vm2505, %v2588, %v2587
  %2590 = vrot.lane.b32.xlu0 %v2575, 64
  %v2591 = vpop.permute.xlu0 %2590
  %2592 = vrot.lane.b32.xlu0 %v2589, 64
  %v2593 = vpop.permute.xlu0 %2592
  %vm2596 = vcmask 785920
  %2597 = vst.msk [vmem:[%s4] sm:$0xff] %vm2596, %v2591
  %2598 = vst.msk [vmem:[%s4 + $0x10] sm:$0xff] %vm2596, %v2593
  %v2599 = vrot.slane %v2454, 3
  %v2600 = vrot.slane %v2455, 2
  %v2601 = vsel %vm2487, %v2600, %v2599
  %v2602 = vrot.slane %v2456, 1
  %v2603 = vsel %vm2490, %v2602, %v2601
  %v2604 = vsel %vm2493, %v2457, %v2603
  %v2605 = vrot.slane %v2458, 7
  %v2606 = vsel %vm2496, %v2605, %v2604
  %v2607 = vrot.slane %v2459, 6
  %v2608 = vsel %vm2499, %v2607, %v2606
  %v2609 = vrot.slane %v2460, 5
  %v2610 = vsel %vm2502, %v2609, %v2608
  %v2611 = vrot.slane %v2461, 4
  %v2612 = vsel %vm2505, %v2611, %v2610
  %v2613 = vrot.slane %v2462, 3
  %v2614 = vrot.slane %v2463, 2
  %v2615 = vsel %vm2487, %v2614, %v2613
  %v2616 = vrot.slane %v2464, 1
  %v2617 = vsel %vm2490, %v2616, %v2615
  %v2618 = vsel %vm2493, %v2465, %v2617
  %v2619 = vrot.slane %v2466, 7
  %v2620 = vsel %vm2496, %v2619, %v2618
  %v2621 = vrot.slane %v2467, 6
  %v2622 = vsel %vm2499, %v2621, %v2620
  %v2623 = vrot.slane %v2468, 5
  %v2624 = vsel %vm2502, %v2623, %v2622
  %v2625 = vrot.slane %v2469, 4
  %v2626 = vsel %vm2505, %v2625, %v2624
  %2627 = vrot.lane.b32.xlu0 %v2612, 96
  %v2628 = vpop.permute.xlu0 %2627
  %2629 = vrot.lane.b32.xlu0 %v2626, 96
  %v2630 = vpop.permute.xlu0 %2629
  %vm2633 = vcmask 1048320
  %2634 = vst.msk [vmem:[%s4] sm:$0xff] %vm2633, %v2628
  %2635 = vst.msk [vmem:[%s4 + $0x10] sm:$0xff] %vm2633, %v2630
  %v2636 = vrot.slane %v2454, 4
  %v2637 = vrot.slane %v2455, 3
  %v2638 = vsel %vm2487, %v2637, %v2636
  %v2639 = vrot.slane %v2456, 2
  %v2640 = vsel %vm2490, %v2639, %v2638
  %v2641 = vrot.slane %v2457, 1
  %v2642 = vsel %vm2493, %v2641, %v2640
  %v2643 = vsel %vm2496, %v2458, %v2642
  %v2644 = vrot.slane %v2459, 7
  %v2645 = vsel %vm2499, %v2644, %v2643
  %v2646 = vrot.slane %v2460, 6
  %v2647 = vsel %vm2502, %v2646, %v2645
  %v2648 = vrot.slane %v2461, 5
  %v2649 = vsel %vm2505, %v2648, %v2647
  %v2650 = vrot.slane %v2462, 4
  %v2651 = vrot.slane %v2463, 3
  %v2652 = vsel %vm2487, %v2651, %v2650
  %v2653 = vrot.slane %v2464, 2
  %v2654 = vsel %vm2490, %v2653, %v2652
  %v2655 = vrot.slane %v2465, 1
  %v2656 = vsel %vm2493, %v2655, %v2654
  %v2657 = vsel %vm2496, %v2466, %v2656
  %v2658 = vrot.slane %v2467, 7
  %v2659 = vsel %vm2499, %v2658, %v2657
  %v2660 = vrot.slane %v2468, 6
  %v2661 = vsel %vm2502, %v2660, %v2659
  %v2662 = vrot.slane %v2469, 5
  %v2663 = vsel %vm2505, %v2662, %v2661
  %2666 = vst.msk [vmem:[%s4 + $0x8] sm:$0xff] %vm90, %v2649
  %2667 = vst.msk [vmem:[%s4 + $0x18] sm:$0xff] %vm90, %v2663
  %v2668 = vrot.slane %v2454, 5
  %v2669 = vrot.slane %v2455, 4
  %v2670 = vsel %vm2487, %v2669, %v2668
  %v2671 = vrot.slane %v2456, 3
  %v2672 = vsel %vm2490, %v2671, %v2670
  %v2673 = vrot.slane %v2457, 2
  %v2674 = vsel %vm2493, %v2673, %v2672
  %v2675 = vrot.slane %v2458, 1
  %v2676 = vsel %vm2496, %v2675, %v2674
  %v2677 = vsel %vm2499, %v2459, %v2676
  %v2678 = vrot.slane %v2460, 7
  %v2679 = vsel %vm2502, %v2678, %v2677
  %v2680 = vrot.slane %v2461, 6
  %v2681 = vsel %vm2505, %v2680, %v2679
  %v2682 = vrot.slane %v2462, 5
  %v2683 = vrot.slane %v2463, 4
  %v2684 = vsel %vm2487, %v2683, %v2682
  %v2685 = vrot.slane %v2464, 3
  %v2686 = vsel %vm2490, %v2685, %v2684
  %v2687 = vrot.slane %v2465, 2
  %v2688 = vsel %vm2493, %v2687, %v2686
  %v2689 = vrot.slane %v2466, 1
  %v2690 = vsel %vm2496, %v2689, %v2688
  %v2691 = vsel %vm2499, %v2467, %v2690
  %v2692 = vrot.slane %v2468, 7
  %v2693 = vsel %vm2502, %v2692, %v2691
  %v2694 = vrot.slane %v2469, 6
  %v2695 = vsel %vm2505, %v2694, %v2693
  %2696 = vrot.lane.b32.xlu0 %v2681, 32
  %v2697 = vpop.permute.xlu0 %2696
  %2698 = vrot.lane.b32.xlu0 %v2695, 32
  %v2699 = vpop.permute.xlu0 %2698
  %2702 = vst.msk [vmem:[%s4 + $0x8] sm:$0xff] %vm2559, %v2697
  %2703 = vst.msk [vmem:[%s4 + $0x18] sm:$0xff] %vm2559, %v2699
  %v2704 = vrot.slane %v2454, 6
  %v2705 = vrot.slane %v2455, 5
  %v2706 = vsel %vm2487, %v2705, %v2704
  %v2707 = vrot.slane %v2456, 4
  %v2708 = vsel %vm2490, %v2707, %v2706
  %v2709 = vrot.slane %v2457, 3
  %v2710 = vsel %vm2493, %v2709, %v2708
  %v2711 = vrot.slane %v2458, 2
  %v2712 = vsel %vm2496, %v2711, %v2710
  %v2713 = vrot.slane %v2459, 1
  %v2714 = vsel %vm2499, %v2713, %v2712
  %v2715 = vsel %vm2502, %v2460, %v2714
  %v2716 = vrot.slane %v2461, 7
  %v2717 = vsel %vm2505, %v2716, %v2715
  %v2718 = vrot.slane %v2462, 6
  %v2719 = vrot.slane %v2463, 5
  %v2720 = vsel %vm2487, %v2719, %v2718
  %v2721 = vrot.slane %v2464, 4
  %v2722 = vsel %vm2490, %v2721, %v2720
  %v2723 = vrot.slane %v2465, 3
  %v2724 = vsel %vm2493, %v2723, %v2722
  %v2725 = vrot.slane %v2466, 2
  %v2726 = vsel %vm2496, %v2725, %v2724
  %v2727 = vrot.slane %v2467, 1
  %v2728 = vsel %vm2499, %v2727, %v2726
  %v2729 = vsel %vm2502, %v2468, %v2728
  %v2730 = vrot.slane %v2469, 7
  %v2731 = vsel %vm2505, %v2730, %v2729
  %2732 = vrot.lane.b32.xlu0 %v2717, 64
  %v2733 = vpop.permute.xlu0 %2732
  %2734 = vrot.lane.b32.xlu0 %v2731, 64
  %v2735 = vpop.permute.xlu0 %2734
  %2738 = vst.msk [vmem:[%s4 + $0x8] sm:$0xff] %vm2596, %v2733
  %2739 = vst.msk [vmem:[%s4 + $0x18] sm:$0xff] %vm2596, %v2735
  %v2740 = vrot.slane %v2454, 7
  %v2741 = vrot.slane %v2455, 6
  %v2742 = vsel %vm2487, %v2741, %v2740
  %v2743 = vrot.slane %v2456, 5
  %v2744 = vsel %vm2490, %v2743, %v2742
  %v2745 = vrot.slane %v2457, 4
  %v2746 = vsel %vm2493, %v2745, %v2744
  %v2747 = vrot.slane %v2458, 3
  %v2748 = vsel %vm2496, %v2747, %v2746
  %v2749 = vrot.slane %v2459, 2
  %v2750 = vsel %vm2499, %v2749, %v2748
  %v2751 = vrot.slane %v2460, 1
  %v2752 = vsel %vm2502, %v2751, %v2750
  %v2753 = vsel %vm2505, %v2461, %v2752
  %v2754 = vrot.slane %v2462, 7
  %v2755 = vrot.slane %v2463, 6
  %v2756 = vsel %vm2487, %v2755, %v2754
  %v2757 = vrot.slane %v2464, 5
  %v2758 = vsel %vm2490, %v2757, %v2756
  %v2759 = vrot.slane %v2465, 4
  %v2760 = vsel %vm2493, %v2759, %v2758
  %v2761 = vrot.slane %v2466, 3
  %v2762 = vsel %vm2496, %v2761, %v2760
  %v2763 = vrot.slane %v2467, 2
  %v2764 = vsel %vm2499, %v2763, %v2762
  %v2765 = vrot.slane %v2468, 1
  %v2766 = vsel %vm2502, %v2765, %v2764
  %v2767 = vsel %vm2505, %v2469, %v2766
  %2768 = vrot.lane.b32.xlu0 %v2753, 96
  %v2769 = vpop.permute.xlu0 %2768
  %2770 = vrot.lane.b32.xlu0 %v2767, 96
  %v2771 = vpop.permute.xlu0 %2770
  %2774 = vst.msk [vmem:[%s4 + $0x8] sm:$0xff] %vm2633, %v2769
  %2775 = vst.msk [vmem:[%s4 + $0x18] sm:$0xff] %vm2633, %v2771
  // Predicated region
  $region18: #{factorized_reduce.1} parent=0 // pred_check
    _
  $region19: #{factorized_reduce.1} parent=0 // pred_check_branch
    %2777 = sbr.rel (0) target = $region21
  $region20: #{factorized_reduce.1} parent=0 // pred_region
    _
  $region21: #{factorized_reduce.1} parent=0 // pred_fallthru
    _
  // Predicated region
  $region22: #{factorized_reduce.1} parent=0 // pred_check
    _
  $region23: #{factorized_reduce.1} parent=0 // pred_check_branch
    %2779 = sbr.rel (0) target = $region25
  $region24: #{factorized_reduce.1} parent=0 // pred_region
    _
  $region25: #{factorized_reduce.1} parent=0 // pred_fallthru
    _

</llo_original>
